<compile_context>
chip_gen: v7x
topology: tpu7x:2x2x1
jax: 0.10.0
libtpu: 0.0.40
codegen_flags: <defaults>
</compile_context>

<pallas_src>
import math

import jax
import jax.numpy as jnp
from jax import lax
from jax.experimental import pallas as pl
from jax.experimental.pallas import tpu as pltpu

FEAT = 1024          # hard-coded in the PyTorch module (nn.Linear(1024, 1024))
NUM_LAYERS = 4
TK = 512             # tile over the hidden (intermediate) dimension
INV_SQRT2 = 1.0 / math.sqrt(2.0)


def _exact_gelu(x):
    # PyTorch nn.GELU() default is the exact (erf) formulation.
    return 0.5 * x * (1.0 + lax.erf(x * INV_SQRT2))


def fused_four_mlp_kernel(x_ref, w1_ref, w2t_ref, o_ref, xcur_ref):
    """Grid is (layer, hidden-tile). For each layer l:

        out_l = sum_k  gelu(x_l @ W1_l[kTK:(k+1)TK, :]^T) @ W2_l^T[kTK:(k+1)TK, :]

    o_ref is VMEM-resident across the whole grid (constant output block index)
    and doubles as the per-layer accumulator; xcur_ref carries the activation
    from layer l into layer l+1.
    """
    l = pl.program_id(0)
    k = pl.program_id(1)

    # Layer prologue: load this layer's input activation and zero the accumulator.
    @pl.when((k == 0) & (l == 0))
    def _():
        xcur_ref[...] = x_ref[...]
        o_ref[...] = jnp.zeros_like(o_ref)

    @pl.when((k == 0) & (l > 0))
    def _():
        xcur_ref[...] = o_ref[...]          # previous layer's finished output
        o_ref[...] = jnp.zeros_like(o_ref)

    # First matmul: (B, FEAT) x (TK, FEAT) contracting the last dim of both
    # -> (B, TK).  W1 tile stays in PyTorch (out, in) layout; the MXU consumes
    # this contraction natively, so no transpose is materialized.
    s = lax.dot_general(
        xcur_ref[...], w1_ref[...],
        dimension_numbers=(((1,), (1,)), ((), ())),
        preferred_element_type=jnp.float32,
    )
    t = _exact_gelu(s)

    # Second matmul: (B, TK) @ (TK, FEAT) -> (B, FEAT); w2t tile is already
    # (in, out) layout, contiguous in HBM.
    o_ref[...] += jnp.dot(t, w2t_ref[...], preferred_element_type=jnp.float32)


def four_mlp_forward(x, w1_stack, w2t_stack):
    """x: (B, 1024) f32.  w1_stack: (4, 1024, 1024) in (out, in) layout.
    w2t_stack: (4, 1024, 1024) pre-transposed to (in, out) layout."""
    B, F = x.shape
    assert F == FEAT
    assert w1_stack.shape == (NUM_LAYERS, FEAT, FEAT)
    assert w2t_stack.shape == (NUM_LAYERS, FEAT, FEAT)

    return pl.pallas_call(
        fused_four_mlp_kernel,
        out_shape=jax.ShapeDtypeStruct((B, FEAT), jnp.float32),
        grid_spec=pltpu.PrefetchScalarGridSpec(
            num_scalar_prefetch=0,
            grid=(NUM_LAYERS, FEAT // TK),
            in_specs=[
                # x: resident for the whole grid (only read at (0, 0)).
                pl.BlockSpec((B, FEAT), lambda l, k: (0, 0)),
                # W1 rows k-tile of layer l (contiguous 2 MiB DMA).
                pl.BlockSpec((None, TK, FEAT), lambda l, k: (l, k, 0)),
                # W2^T rows k-tile of layer l (contiguous 2 MiB DMA).
                pl.BlockSpec((None, TK, FEAT), lambda l, k: (l, k, 0)),
            ],
            # Constant block index over both grid axes -> resident accumulator.
            out_specs=pl.BlockSpec((B, FEAT), lambda l, k: (0, 0)),
            scratch_shapes=[pltpu.VMEM((B, FEAT), jnp.float32)],  # activation carry
        ),
        compiler_params=pltpu.CompilerParams(
            dimension_semantics=("arbitrary", "arbitrary"),
        ),
    )(x, w1_stack, w2t_stack)


def pack_params(params):
    """params: list of 4 (w1, w2) pairs in PyTorch (out, in) layout ->
    (w1_stack, w2t_stack) ready for the fused kernel."""
    w1_stack = jnp.stack([w1 for w1, _ in params])
    w2t_stack = jnp.stack([w2.T for _, w2 in params])
    return w1_stack, w2t_stack


def make_four_mlp_params():
    """Deterministic weights matching MLP.__init__: fc1.fill_(value), fc2.fill_(2*value)."""
    params = []
    for value in (0.0, 1.0, 2.0, 3.0):  # mlp1..mlp4
        w1 = jnp.full((FEAT, FEAT), value, dtype=jnp.float32)
        w2 = jnp.full((FEAT, FEAT), value * 2.0, dtype=jnp.float32)
        params.append((w1, w2))
    return params


def make_random_params(key, scale=0.03):
    """Non-degenerate weights for a meaningful numerical self-test."""
    params = []
    for i in range(NUM_LAYERS):
        k1, k2, key = jax.random.split(key, 3)
        w1 = scale * jax.random.normal(k1, (FEAT, FEAT), dtype=jnp.float32)
        w2 = scale * jax.random.normal(k2, (FEAT, FEAT), dtype=jnp.float32)
        params.append((w1, w2))
    return params


def four_mlp_reference(x, params):
    for w1, w2 in params:
        t = x @ w1.T
        t = 0.5 * t * (1.0 + lax.erf(t * INV_SQRT2))
        x = t @ w2.T
    return x


if __name__ == "__main__":
    key = jax.random.PRNGKey(0)
    kx, kw = jax.random.split(key)
    B = 8
    x = jax.random.normal(kx, (B, FEAT), dtype=jnp.float32)

    # --- main (non-vacuous) test: random, distinct weights per layer ---
    rnd_params = make_random_params(kw)
    w1_stack, w2t_stack = pack_params(rnd_params)

    out = four_mlp_forward(x, w1_stack, w2t_stack)
    out = jax.block_until_ready(out)

    ref = four_mlp_reference(x, rnd_params)
    assert out.shape == (B, FEAT)
    assert jnp.allclose(out, ref, rtol=1e-4, atol=1e-4), "mismatch vs reference (random weights)"

    # --- module-faithful constant-fill weights (mlp1 weights are 0 -> output is 0) ---
    fill_params = make_four_mlp_params()
    w1f, w2tf = pack_params(fill_params)
    out_fill = jax.block_until_ready(four_mlp_forward(x, w1f, w2tf))
    ref_fill = four_mlp_reference(x, fill_params)
    assert jnp.allclose(out_fill, ref_fill, rtol=1e-4, atol=1e-4), "mismatch vs reference (fill weights)"

    print("KERNEL_OK")
</pallas_src>

<mosaic_0001>
module attributes {stable_mosaic.version = 11 : i64} {
  func.func @fused_four_mlp_kernel(%arg0: i32, %arg1: i32, %arg2: memref<8x1024xf32, #tpu.memory_space<vmem>>, %arg3: memref<1x512x1024xf32, #tpu.memory_space<vmem>>, %arg4: memref<1x512x1024xf32, #tpu.memory_space<vmem>>, %arg5: memref<8x1024xf32, #tpu.memory_space<vmem>>, %arg6: memref<8x1024xf32, #tpu.memory_space<vmem>>) attributes {dimension_semantics = [#tpu.dimension_semantics<arbitrary>, #tpu.dimension_semantics<arbitrary>], iteration_bounds = array<i64: 4, 2>, scalar_prefetch = 0 : i64, scratch_operands = 1 : i64, tpu.core_type = #tpu.core_type<tc>, window_params = [{pipeline_mode = #tpu.pipeline_mode<synchronous>, transform_indices = @transform_0, window_bounds = array<i64: 8, 1024>}, {transform_indices = @transform_1, window_bounds = array<i64: 1, 512, 1024>}, {transform_indices = @transform_2, window_bounds = array<i64: 1, 512, 1024>}, {pipeline_mode = #tpu.pipeline_mode<synchronous>, transform_indices = @transform_3, window_bounds = array<i64: 8, 1024>}]} {
    %c0_i32 = arith.constant 0 : i32
    %0 = arith.cmpi eq, %arg1, %c0_i32 : i32
    %c0_i32_0 = arith.constant 0 : i32
    %1 = arith.cmpi eq, %arg0, %c0_i32_0 : i32
    %2 = arith.andi %0, %1 : i1
    %3 = arith.extui %2 : i1 to i32
    %c0_i32_1 = arith.constant 0 : i32
    %4 = arith.cmpi ne, %3, %c0_i32_1 : i32
    scf.if %4 {
      %c0_20 = arith.constant 0 : index
      %c0_21 = arith.constant 0 : index
      %28 = vector.load %arg2[%c0_20, %c0_21] : memref<8x1024xf32, #tpu.memory_space<vmem>>, vector<8x1024xf32>
      %c0_22 = arith.constant 0 : index
      %c0_23 = arith.constant 0 : index
      %29 = vector.load %arg6[%c0_22, %c0_23] : memref<8x1024xf32, #tpu.memory_space<vmem>>, vector<8x1024xf32>
      tpu.vector_store %arg6[%c0_22, %c0_23], %28 {strides = array<i32>} : memref<8x1024xf32, #tpu.memory_space<vmem>>, vector<8x1024xf32>,
      %cst_24 = arith.constant 0.000000e+00 : f32
      %30 = vector.broadcast %cst_24 : f32 to vector<8x1024xf32>
      %c0_25 = arith.constant 0 : index
      %c0_26 = arith.constant 0 : index
      %31 = vector.load %arg5[%c0_25, %c0_26] : memref<8x1024xf32, #tpu.memory_space<vmem>>, vector<8x1024xf32>
      tpu.vector_store %arg5[%c0_25, %c0_26], %30 {strides = array<i32>} : memref<8x1024xf32, #tpu.memory_space<vmem>>, vector<8x1024xf32>,
    } else {
    }
    %c0_i32_2 = arith.constant 0 : i32
    %5 = arith.cmpi eq, %arg1, %c0_i32_2 : i32
    %c0_i32_3 = arith.constant 0 : i32
    %6 = arith.cmpi sgt, %arg0, %c0_i32_3 : i32
    %7 = arith.andi %5, %6 : i1
    %8 = arith.extui %7 : i1 to i32
    %c0_i32_4 = arith.constant 0 : i32
    %9 = arith.cmpi ne, %8, %c0_i32_4 : i32
    scf.if %9 {
      %c0_20 = arith.constant 0 : index
      %c0_21 = arith.constant 0 : index
      %28 = vector.load %arg5[%c0_20, %c0_21] : memref<8x1024xf32, #tpu.memory_space<vmem>>, vector<8x1024xf32>
      %c0_22 = arith.constant 0 : index
      %c0_23 = arith.constant 0 : index
      %29 = vector.load %arg6[%c0_22, %c0_23] : memref<8x1024xf32, #tpu.memory_space<vmem>>, vector<8x1024xf32>
      tpu.vector_store %arg6[%c0_22, %c0_23], %28 {strides = array<i32>} : memref<8x1024xf32, #tpu.memory_space<vmem>>, vector<8x1024xf32>,
      %cst_24 = arith.constant 0.000000e+00 : f32
      %30 = vector.broadcast %cst_24 : f32 to vector<8x1024xf32>
      %c0_25 = arith.constant 0 : index
      %c0_26 = arith.constant 0 : index
      %31 = vector.load %arg5[%c0_25, %c0_26] : memref<8x1024xf32, #tpu.memory_space<vmem>>, vector<8x1024xf32>
      tpu.vector_store %arg5[%c0_25, %c0_26], %30 {strides = array<i32>} : memref<8x1024xf32, #tpu.memory_space<vmem>>, vector<8x1024xf32>,
    } else {
    }
    %c0 = arith.constant 0 : index
    %c0_5 = arith.constant 0 : index
    %10 = vector.load %arg6[%c0, %c0_5] : memref<8x1024xf32, #tpu.memory_space<vmem>>, vector<8x1024xf32>
    %c0_6 = arith.constant 0 : index
    %c0_7 = arith.constant 0 : index
    %c0_8 = arith.constant 0 : index
    %11 = vector.load %arg3[%c0_6, %c0_7, %c0_8] : memref<1x512x1024xf32, #tpu.memory_space<vmem>>, vector<1x512x1024xf32>
    %12 = vector.shape_cast %11 : vector<1x512x1024xf32> to vector<512x1024xf32>
    %cst = arith.constant dense<0.000000e+00> : vector<8x512xf32>
    %13 = tpu.matmul %10, %12, %cst {dimension_numbers = #tpu.dot_dimension_numbers<[1], [1], [0], [0], [0, 0, 1, 0], [], []>} : vector<8x1024xf32>, vector<512x1024xf32>, vector<8x512xf32> -> vector<8x512xf32>
    %cst_9 = arith.constant 5.000000e-01 : f32
    %14 = vector.broadcast %cst_9 : f32 to vector<8x512xf32>
    %15 = arith.mulf %14, %13 : vector<8x512xf32>
    %cst_10 = arith.constant 0.707106769 : f32
    %16 = vector.broadcast %cst_10 : f32 to vector<8x512xf32>
    %17 = arith.mulf %13, %16 : vector<8x512xf32>
    %18 = math.erf %17 : vector<8x512xf32>
    %cst_11 = arith.constant 1.000000e+00 : f32
    %19 = vector.broadcast %cst_11 : f32 to vector<8x512xf32>
    %20 = arith.addf %19, %18 : vector<8x512xf32>
    %21 = arith.mulf %15, %20 : vector<8x512xf32>
    %c0_12 = arith.constant 0 : index
    %c0_13 = arith.constant 0 : index
    %22 = vector.load %arg5[%c0_12, %c0_13] : memref<8x1024xf32, #tpu.memory_space<vmem>>, vector<8x1024xf32>
    %c0_14 = arith.constant 0 : index
    %c0_15 = arith.constant 0 : index
    %c0_16 = arith.constant 0 : index
    %23 = vector.load %arg4[%c0_14, %c0_15, %c0_16] : memref<1x512x1024xf32, #tpu.memory_space<vmem>>, vector<1x512x1024xf32>
    %24 = vector.shape_cast %23 : vector<1x512x1024xf32> to vector<512x1024xf32>
    %cst_17 = arith.constant dense<0.000000e+00> : vector<8x1024xf32>
    %25 = tpu.matmul %21, %24, %cst_17 {dimension_numbers = #tpu.dot_dimension_numbers<[1], [0], [0], [1], [0, 0, 1, 1], [], []>} : vector<8x512xf32>, vector<512x1024xf32>, vector<8x1024xf32> -> vector<8x1024xf32>
    %26 = arith.addf %22, %25 : vector<8x1024xf32>
    %c0_18 = arith.constant 0 : index
    %c0_19 = arith.constant 0 : index
    %27 = vector.load %arg5[%c0_18, %c0_19] : memref<8x1024xf32, #tpu.memory_space<vmem>>, vector<8x1024xf32>
    tpu.vector_store %arg5[%c0_18, %c0_19], %26 {strides = array<i32>} : memref<8x1024xf32, #tpu.memory_space<vmem>>, vector<8x1024xf32>,
    return
  }
  func.func @transform_0(%arg0: i32, %arg1: i32) -> (i32, i32) {
    %c0_i32 = arith.constant 0 : i32
    %c0_i32_0 = arith.constant 0 : i32
    %c0_i32_1 = arith.constant 0 : i32
    return %c0_i32, %c0_i32_0 : i32, i32
  }
  func.func @transform_1(%arg0: i32, %arg1: i32) -> (i32, i32, i32) {
    %c0_i32 = arith.constant 0 : i32
    %c0_i32_0 = arith.constant 0 : i32
    return %arg0, %arg1, %c0_i32 : i32, i32, i32
  }
  func.func @transform_2(%arg0: i32, %arg1: i32) -> (i32, i32, i32) {
    %c0_i32 = arith.constant 0 : i32
    %c0_i32_0 = arith.constant 0 : i32
    return %arg0, %arg1, %c0_i32 : i32, i32, i32
  }
  func.func @transform_3(%arg0: i32, %arg1: i32) -> (i32, i32) {
    %c0_i32 = arith.constant 0 : i32
    %c0_i32_0 = arith.constant 0 : i32
    %c0_i32_1 = arith.constant 0 : i32
    return %c0_i32, %c0_i32_0 : i32, i32
  }
}

</mosaic_0001>

<llo_original>
// kernel: tpu_custom_call.1
$region0: #{tpu_custom_call.1}
  #allocation0 [shape = 'u32[]', space=smem, size = 0x4, offset = 0x4, fixed_abs, tag = 'smem constant byte address 0x4 - core index']
  #allocation1 [shape = 'u32[144,128]{1,0:T(1,128)}', space=vmem, size = 0x12000, scoped, tag = 'internal scratch']
  #allocation2 [shape = 'f32[8,1024]{1,0:T(8,128)}', space=vmem, size = 0x8000, scoped, tag = 'scratch operand']
  %s0 = inlined_call_operand.hbm [shape: f32[8,1024], index: 0, kind: input, shape index: {}]
  %s1 = inlined_call_operand.hbm [shape: f32[4,1024,1024], index: 1, kind: input, shape index: {}]
  %s2 = inlined_call_operand.hbm [shape: f32[4,1024,1024], index: 2, kind: input, shape index: {}]
  %s3 = inlined_call_operand.hbm [shape: f32[8,1024], index: 3, kind: output, shape index: {}]
  %s4 = sld [smem:[#allocation0]]
  $region65: #{tpu_custom_call.1} parent=0
    _
  %s6 = ssub.s32 1, %s4
  %s7 = scalar_select 0, %s6, %s4
  $region1: #{tpu_custom_call.1} parent=0
    #allocation3 [shape = 'u8[32768]{0}', space=vmem, size = 0x8000, scoped, tag = 'input window, operand 0, single buffered']
    #allocation4 [shape = 's32[2]{0}', space=sflag, size = 0x8, scoped, tag = 'scoped memory for tpu_custom_call.1']
    #allocation5 [shape = 's32[2]{0}', space=sflag, size = 0x8, scoped, tag = 'scoped memory for tpu_custom_call.1']
    #allocation6 [shape = 'u8[4194304]{0}', space=vmem, size = 0x400000, scoped, tag = 'input window, operand 1']
    #allocation7 [shape = 's32[2]{0}', space=sflag, size = 0x8, scoped, tag = 'scoped memory for tpu_custom_call.1']
    #allocation8 [shape = 'u8[4194304]{0}', space=vmem, size = 0x400000, scoped, tag = 'input window, operand 2']
    #allocation9 [shape = 'u8[32768]{0}', space=vmem, size = 0x8000, scoped, tag = 'output window, operand 0, single buffered']
    %8 = vsyncpa [#allocation4], 0
    %9 = vsyncpa [#allocation7], 0
    %s10 = scalar_lea.sflag [#allocation7], 1
    %11 = vsyncpa %s10, 0
    %12 = vsyncpa [#allocation5], 0
    loop: start=0, step=1, limit=10
    $region2: #{tpu_custom_call.1} parent=1 // loop_pre_header
      _
    $region3: #{tpu_custom_call.1} parent=1 // loop_header
      %s14 = sphi 0, %s18
      %p15 = scmp.ge.s32.totalorder %s14, 10
      %s21 = sphi 0, %s33
      %s22 = sphi 0, %s29
      %s23 = sphi 0, %s21
      %s24 = sphi 0, %s22
      %s25 = sphi 0, %s23
      %s26 = sphi 0, %s24
      %s34 = sphi 0, %s34
      %s36 = sphi 0, %s34
      %s37 = sphi 0, %s36
      %s51 = sphi 0, %s37
      %s59 = sphi 0, %s61
      %s62 = sphi 0, %s59
      %s63 = sphi 0, %s62
      %s79 = sphi 0, %s63
      %s87 = sphi 0, %s89
      %s90 = sphi 0, %s87
      %s91 = sphi 0, %s90
      %s107 = sphi 0, %s91
      %s111 = sphi 0, %s111
      %s113 = sphi 0, %s111
      %s114 = sphi 0, %s113
      %s128 = sphi 0, %s114
    $region4: #{tpu_custom_call.1} parent=1 // loop_header_branch
      %17 = sbr.rel (%p15) target = $region8
    $region5: #{tpu_custom_call.1} parent=1 // loop_body
      %s19 = ssub.s32 %s14, 1
      %s20 = ssub.s32 %s14, 2
      %s27 = sadd.s32 1, %s22
      %p28 = scmp.ge.s32.totalorder %s27, 2
      %s29 = scalar_select %p28, 0, %s27
      %s30 = sadd.s32 1, %s21
      %s31 = scalar_select %p28, %s30, %s21
      %p32 = scmp.ge.s32.totalorder %s31, 4
      %s33 = scalar_select %p32, 0, %s31
      %s35 = sadd.s32 %s34, 1
      %p38 = scmp.eq.s32.totalorder %s14, 7
      %p39 = scmp.ne.s32.totalorder %s34, %s36
      %p40 = scmp.eq.s32.totalorder %s14, 0
      %p41 = por %p39, %p40
      %p42 = scmp.ne.s32.totalorder %s34, %s36
      %p43 = scmp.eq.s32.totalorder %s19, 7
      %p44 = por %p42, %p43
      %p45 = scmp.ne.s32.totalorder %s36, %s37
      %p46 = scmp.eq.s32.totalorder %s19, 0
      %p47 = por %p45, %p46
      %p48 = scmp.ne.s32.totalorder %s36, %s37
      %p49 = scmp.eq.s32.totalorder %s20, 7
      %p50 = por %p48, %p49
      %p52 = scmp.ne.s32.totalorder %s37, %s51
      %p53 = scmp.eq.s32.totalorder %s20, 0
      %p54 = por %p52, %p53
      %s55 = ssub.s32 %s21, %s33
      %s56 = ssub.s32 %s22, %s29
      %s57 = sor.u32 %s55, %s56
      %p58 = scmp.eq.s32.totalorder %s57, 0
      %s60 = sadd.s32 %s59, 1
      %s61 = scalar_select %p58, %s59, %s60
      %p64 = pneg %p58
      %p65 = scmp.eq.s32.totalorder %s14, 7
      %p66 = por %p64, %p65
      %p67 = scmp.ne.s32.totalorder %s59, %s62
      %p68 = scmp.eq.s32.totalorder %s14, 0
      %p69 = por %p67, %p68
      %p70 = scmp.ne.s32.totalorder %s59, %s62
      %p71 = scmp.eq.s32.totalorder %s19, 7
      %p72 = por %p70, %p71
      %p73 = scmp.ne.s32.totalorder %s62, %s63
      %p74 = scmp.eq.s32.totalorder %s19, 0
      %p75 = por %p73, %p74
      %p76 = scmp.ne.s32.totalorder %s62, %s63
      %p77 = scmp.eq.s32.totalorder %s20, 7
      %p78 = por %p76, %p77
      %p80 = scmp.ne.s32.totalorder %s63, %s79
      %p81 = scmp.eq.s32.totalorder %s20, 0
      %p82 = por %p80, %p81
      %s83 = ssub.s32 %s21, %s33
      %s84 = ssub.s32 %s22, %s29
      %s85 = sor.u32 %s83, %s84
      %p86 = scmp.eq.s32.totalorder %s85, 0
      %s88 = sadd.s32 %s87, 1
      %s89 = scalar_select %p86, %s87, %s88
      %p92 = pneg %p86
      %p93 = scmp.eq.s32.totalorder %s14, 7
      %p94 = por %p92, %p93
      %p95 = scmp.ne.s32.totalorder %s87, %s90
      %p96 = scmp.eq.s32.totalorder %s14, 0
      %p97 = por %p95, %p96
      %p98 = scmp.ne.s32.totalorder %s87, %s90
      %p99 = scmp.eq.s32.totalorder %s19, 7
      %p100 = por %p98, %p99
      %p101 = scmp.ne.s32.totalorder %s90, %s91
      %p102 = scmp.eq.s32.totalorder %s19, 0
      %p103 = por %p101, %p102
      %p104 = scmp.ne.s32.totalorder %s90, %s91
      %p105 = scmp.eq.s32.totalorder %s20, 7
      %p106 = por %p104, %p105
      %p108 = scmp.ne.s32.totalorder %s91, %s107
      %p109 = scmp.eq.s32.totalorder %s20, 0
      %p110 = por %p108, %p109
      %s112 = sadd.s32 %s111, 1
      %p115 = scmp.eq.s32.totalorder %s14, 7
      %p116 = scmp.ne.s32.totalorder %s111, %s113
      %p117 = scmp.eq.s32.totalorder %s14, 0
      %p118 = por %p116, %p117
      %p119 = scmp.ne.s32.totalorder %s111, %s113
      %p120 = scmp.eq.s32.totalorder %s19, 7
      %p121 = por %p119, %p120
      %p122 = scmp.ne.s32.totalorder %s113, %s114
      %p123 = scmp.eq.s32.totalorder %s19, 0
      %p124 = por %p122, %p123
      %p125 = scmp.ne.s32.totalorder %s113, %s114
      %p126 = scmp.eq.s32.totalorder %s20, 7
      %p127 = por %p125, %p126
      %p129 = scmp.ne.s32.totalorder %s114, %s128
      %p130 = scmp.eq.s32.totalorder %s20, 0
      %p131 = por %p129, %p130
      %p132 = scmp.le.s32.totalorder 1, %s14
      %p133 = scmp.lt.s32.totalorder %s14, 9
      %p134 = pnand %p132, %p133
      %p135 = pneg %p134
      // Predicated region
      $region9: #{tpu_custom_call.1} parent=5 // pred_check
        _
      $region10: #{tpu_custom_call.1} parent=5 // pred_check_branch
        %137 = sbr.rel (%p134) target = $region12
      $region11: #{tpu_custom_call.1} parent=5 // pred_region
        %s138 = ssub.s32 %s14, 1
        // Predicated region
        $region13: #{tpu_custom_call.1} parent=11 // pred_check
          %p139 = pneg %p47
        $region14: #{tpu_custom_call.1} parent=11 // pred_check_branch
          %141 = sbr.rel (%p139) target = $region16
        $region15: #{tpu_custom_call.1} parent=11 // pred_region
          %s143 = ssub.s32 1024, 1024
          %144 = vsyncadd [#allocation4], %s143
          %s146 = sshll.u32 [#allocation3], 4
          %s147 = int_to_ptr.vmem [resolvable:$true] %s146
          %149 = dma.hbm_to_vmem [thread:$0]  %s0, 1024, %s147, [#allocation4]
        $region16: #{tpu_custom_call.1} parent=11 // pred_fallthru
          _
      $region12: #{tpu_custom_call.1} parent=5 // pred_fallthru
        _
      %p150 = scmp.lt.s32.totalorder %s14, 8
      // Predicated region
      $region17: #{tpu_custom_call.1} parent=5 // pred_check
        %p151 = pneg %p150
      $region18: #{tpu_custom_call.1} parent=5 // pred_check_branch
        %153 = sbr.rel (%p151) target = $region20
      $region19: #{tpu_custom_call.1} parent=5 // pred_region
        // Predicated region
        $region21: #{tpu_custom_call.1} parent=19 // pred_check
          %p154 = pneg %p69
        $region22: #{tpu_custom_call.1} parent=19 // pred_check_branch
          %156 = sbr.rel (%p154) target = $region24
        $region23: #{tpu_custom_call.1} parent=19 // pred_region
          %s157 = sand.u32 %s14, 1
          %s158 = scalar_lea.sflag [#allocation7], %s157
          %s159 = sand.u32 %s59, 1
          %s160 = smul.addr %s159, 4096
          %s161 = scalar_lea.vmem [#allocation6], %s160
          %s162 = smul.u32 64, %s22
          %s164 = ssub.s32 65536, 65536
          %165 = vsyncadd %s158, %s164
          %s166 = smul.addr %s162, 8
          %s167 = smul.addr %s21, 1024
          %s168 = sadd.s32 %s166, %s167
          %s169 = smul.addr %s168, 128
          %s170 = scalar_lea.hbm %s1, %s169
          %s171 = sshll.u32 %s161, 4
          %s172 = int_to_ptr.vmem [resolvable:$true] %s171
          %177 = dma.hbm_to_vmem [thread:$0]  %s170, 65536, %s172, %s158, 1024, 1024, 64
        $region24: #{tpu_custom_call.1} parent=19 // pred_fallthru
          _
        // Predicated region
        $region25: #{tpu_custom_call.1} parent=19 // pred_check
          %p178 = pneg %p97
        $region26: #{tpu_custom_call.1} parent=19 // pred_check_branch
          %180 = sbr.rel (%p178) target = $region28
        $region27: #{tpu_custom_call.1} parent=19 // pred_region
          %s181 = sand.u32 %s14, 1
          %s182 = scalar_lea.sflag [#allocation7], %s181
          %s183 = sand.u32 %s87, 1
          %s184 = smul.addr %s183, 4096
          %s185 = scalar_lea.vmem [#allocation8], %s184
          %s186 = smul.u32 64, %s22
          %s188 = ssub.s32 65536, 65536
          %189 = vsyncadd %s182, %s188
          %s190 = smul.addr %s186, 8
          %s191 = smul.addr %s21, 1024
          %s192 = sadd.s32 %s190, %s191
          %s193 = smul.addr %s192, 128
          %s194 = scalar_lea.hbm %s2, %s193
          %s195 = sshll.u32 %s185, 4
          %s196 = int_to_ptr.vmem [resolvable:$true] %s195
          %201 = dma.hbm_to_vmem [thread:$0]  %s194, 65536, %s196, %s182, 1024, 1024, 64
        $region28: #{tpu_custom_call.1} parent=19 // pred_fallthru
          _
      $region20: #{tpu_custom_call.1} parent=5 // pred_fallthru
        _
      %p202 = scmp.le.s32.totalorder 1, %s14
      %p203 = scmp.lt.s32.totalorder %s14, 9
      %p204 = pnand %p202, %p203
      %p205 = pneg %p204
      // Predicated region
      $region29: #{tpu_custom_call.1} parent=5 // pred_check
        _
      $region30: #{tpu_custom_call.1} parent=5 // pred_check_branch
        %207 = sbr.rel (%p204) target = $region32
      $region31: #{tpu_custom_call.1} parent=5 // pred_region
        %s208 = ssub.s32 %s14, 1
        // Predicated region
        $region33: #{tpu_custom_call.1} parent=31 // pred_check
          %p209 = pneg %p47
        $region34: #{tpu_custom_call.1} parent=31 // pred_check_branch
          %211 = sbr.rel (%p209) target = $region36
        $region35: #{tpu_custom_call.1} parent=31 // pred_region
          %212 = dma.done [#allocation4], 1024
        $region36: #{tpu_custom_call.1} parent=31 // pred_fallthru
          _
        %s213 = sand.u32 %s19, 1
        %s214 = scalar_lea.sflag [#allocation7], %s213
        %s215 = sand.u32 %s62, 1
        %s216 = smul.addr %s215, 4096
        %s217 = scalar_lea.vmem [#allocation6], %s216
        // Predicated region
        $region37: #{tpu_custom_call.1} parent=31 // pred_check
          %p218 = pneg %p75
        $region38: #{tpu_custom_call.1} parent=31 // pred_check_branch
          %220 = sbr.rel (%p218) target = $region40
        $region39: #{tpu_custom_call.1} parent=31 // pred_region
          %221 = dma.done %s214, 65536
        $region40: #{tpu_custom_call.1} parent=31 // pred_fallthru
          _
        %s222 = sand.u32 %s19, 1
        %s223 = scalar_lea.sflag [#allocation7], %s222
        %s224 = sand.u32 %s90, 1
        %s225 = smul.addr %s224, 4096
        %s226 = scalar_lea.vmem [#allocation8], %s225
        // Predicated region
        $region41: #{tpu_custom_call.1} parent=31 // pred_check
          %p227 = pneg %p103
        $region42: #{tpu_custom_call.1} parent=31 // pred_check_branch
          %229 = sbr.rel (%p227) target = $region44
        $region43: #{tpu_custom_call.1} parent=31 // pred_region
          %230 = dma.done %s223, 65536
        $region44: #{tpu_custom_call.1} parent=31 // pred_fallthru
          _
        %p231 = pneg %p47
        %p232 = pneg %p44
        %s233 = sand.u32 %s19, 1
        %s234 = scalar_lea.sflag [#allocation7], %s233
        %s235 = sand.u32 %s62, 1
        %s236 = smul.addr %s235, 4096
        %s237 = scalar_lea.vmem [#allocation6], %s236
        %p238 = pneg %p75
        %p239 = pneg %p72
        %s240 = sand.u32 %s19, 1
        %s241 = scalar_lea.sflag [#allocation7], %s240
        %s242 = sand.u32 %s90, 1
        %s243 = smul.addr %s242, 4096
        %s244 = scalar_lea.vmem [#allocation8], %s243
        %p245 = pneg %p103
        %p246 = pneg %p100
        %p247 = pneg %p124
        %p248 = pneg %p121
        %s249 = smul.u32 64, %s24
        %s250 = smul.u32 64, %s24
        %p251 = scmp.eq.s32.totalorder %s24, 0
        %p252 = scmp.eq.s32.totalorder %s23, 0
        %p253 = pnand %p251, %p252
        %p254 = pneg %p253
        // Predicated region
        $region45: #{tpu_custom_call.1} parent=31 // pred_check
          _
        $region46: #{tpu_custom_call.1} parent=31 // pred_check_branch
          %256 = sbr.rel (%p253) target = $region48
        $region47: #{tpu_custom_call.1} parent=31 // pred_region
          %v257 = vld [vmem:[#allocation3] sm:$0xff]
          %v258 = vld [vmem:[#allocation3 + $0x8] sm:$0xff]
          %v259 = vld [vmem:[#allocation3 + $0x10] sm:$0xff]
          %v260 = vld [vmem:[#allocation3 + $0x18] sm:$0xff]
          %v261 = vld [vmem:[#allocation3 + $0x20] sm:$0xff]
          %v262 = vld [vmem:[#allocation3 + $0x28] sm:$0xff]
          %v263 = vld [vmem:[#allocation3 + $0x30] sm:$0xff]
          %v264 = vld [vmem:[#allocation3 + $0x38] sm:$0xff]
          %265 = vst [vmem:[#allocation2] sm:$0xff] %v257
          %266 = vst [vmem:[#allocation2 + $0x8] sm:$0xff] %v258
          %267 = vst [vmem:[#allocation2 + $0x10] sm:$0xff] %v259
          %268 = vst [vmem:[#allocation2 + $0x18] sm:$0xff] %v260
          %269 = vst [vmem:[#allocation2 + $0x20] sm:$0xff] %v261
          %270 = vst [vmem:[#allocation2 + $0x28] sm:$0xff] %v262
          %271 = vst [vmem:[#allocation2 + $0x30] sm:$0xff] %v263
          %272 = vst [vmem:[#allocation2 + $0x38] sm:$0xff] %v264
          %273 = vst [vmem:[#allocation9] sm:$0xff] 0.0
          %274 = vst [vmem:[#allocation9 + $0x8] sm:$0xff] 0.0
          %275 = vst [vmem:[#allocation9 + $0x10] sm:$0xff] 0.0
          %276 = vst [vmem:[#allocation9 + $0x18] sm:$0xff] 0.0
          %277 = vst [vmem:[#allocation9 + $0x20] sm:$0xff] 0.0
          %278 = vst [vmem:[#allocation9 + $0x28] sm:$0xff] 0.0
          %279 = vst [vmem:[#allocation9 + $0x30] sm:$0xff] 0.0
          %280 = vst [vmem:[#allocation9 + $0x38] sm:$0xff] 0.0
        $region48: #{tpu_custom_call.1} parent=31 // pred_fallthru
          _
        %p281 = scmp.gt.s32.totalorder %s23, 0
        %p282 = pnand %p251, %p281
        %p283 = pneg %p282
        // Predicated region
        $region49: #{tpu_custom_call.1} parent=31 // pred_check
          _
        $region50: #{tpu_custom_call.1} parent=31 // pred_check_branch
          %285 = sbr.rel (%p282) target = $region52
        $region51: #{tpu_custom_call.1} parent=31 // pred_region
          %v286 = vld [vmem:[#allocation9] sm:$0xff]
          %v287 = vld [vmem:[#allocation9 + $0x8] sm:$0xff]
          %v288 = vld [vmem:[#allocation9 + $0x10] sm:$0xff]
          %v289 = vld [vmem:[#allocation9 + $0x18] sm:$0xff]
          %v290 = vld [vmem:[#allocation9 + $0x20] sm:$0xff]
          %v291 = vld [vmem:[#allocation9 + $0x28] sm:$0xff]
          %v292 = vld [vmem:[#allocation9 + $0x30] sm:$0xff]
          %v293 = vld [vmem:[#allocation9 + $0x38] sm:$0xff]
          %294 = vst [vmem:[#allocation2] sm:$0xff] %v286
          %295 = vst [vmem:[#allocation2 + $0x8] sm:$0xff] %v287
          %296 = vst [vmem:[#allocation2 + $0x10] sm:$0xff] %v288
          %297 = vst [vmem:[#allocation2 + $0x18] sm:$0xff] %v289
          %298 = vst [vmem:[#allocation2 + $0x20] sm:$0xff] %v290
          %299 = vst [vmem:[#allocation2 + $0x28] sm:$0xff] %v291
          %300 = vst [vmem:[#allocation2 + $0x30] sm:$0xff] %v292
          %301 = vst [vmem:[#allocation2 + $0x38] sm:$0xff] %v293
          %302 = vst [vmem:[#allocation9] sm:$0xff] 0.0
          %303 = vst [vmem:[#allocation9 + $0x8] sm:$0xff] 0.0
          %304 = vst [vmem:[#allocation9 + $0x10] sm:$0xff] 0.0
          %305 = vst [vmem:[#allocation9 + $0x18] sm:$0xff] 0.0
          %306 = vst [vmem:[#allocation9 + $0x20] sm:$0xff] 0.0
          %307 = vst [vmem:[#allocation9 + $0x28] sm:$0xff] 0.0
          %308 = vst [vmem:[#allocation9 + $0x30] sm:$0xff] 0.0
          %309 = vst [vmem:[#allocation9 + $0x38] sm:$0xff] 0.0
        $region52: #{tpu_custom_call.1} parent=31 // pred_fallthru
          _
        %v310 = vld [vmem:[#allocation2] sm:$0xff]
        %v311 = vld [vmem:[#allocation2 + $0x8] sm:$0xff]
        %v312 = vld [vmem:[#allocation2 + $0x10] sm:$0xff]
        %v313 = vld [vmem:[#allocation2 + $0x18] sm:$0xff]
        %v314 = vld [vmem:[#allocation2 + $0x20] sm:$0xff]
        %v315 = vld [vmem:[#allocation2 + $0x28] sm:$0xff]
        %v316 = vld [vmem:[#allocation2 + $0x30] sm:$0xff]
        %v317 = vld [vmem:[#allocation2 + $0x38] sm:$0xff]
        %v318 = vld [vmem:[%s217] sm:$0xff]
        %v319 = vld [vmem:[%s217 + $0x8] sm:$0xff]
        %v320 = vld [vmem:[%s217 + $0x10] sm:$0xff]
        %v321 = vld [vmem:[%s217 + $0x18] sm:$0xff]
        %v322 = vld [vmem:[%s217 + $0x20] sm:$0xff]
        %v323 = vld [vmem:[%s217 + $0x28] sm:$0xff]
        %v324 = vld [vmem:[%s217 + $0x30] sm:$0xff]
        %v325 = vld [vmem:[%s217 + $0x38] sm:$0xff]
        %v326 = vld [vmem:[%s217 + $0x40] sm:$0xff]
        %v327 = vld [vmem:[%s217 + $0x48] sm:$0xff]
        %v328 = vld [vmem:[%s217 + $0x50] sm:$0xff]
        %v329 = vld [vmem:[%s217 + $0x58] sm:$0xff]
        %v330 = vld [vmem:[%s217 + $0x60] sm:$0xff]
        %v331 = vld [vmem:[%s217 + $0x68] sm:$0xff]
        %v332 = vld [vmem:[%s217 + $0x70] sm:$0xff]
        %v333 = vld [vmem:[%s217 + $0x78] sm:$0xff]
        %v334 = vld [vmem:[%s217 + $0x80] sm:$0xff]
        %v335 = vld [vmem:[%s217 + $0x88] sm:$0xff]
        %v336 = vld [vmem:[%s217 + $0x90] sm:$0xff]
        %v337 = vld [vmem:[%s217 + $0x98] sm:$0xff]
        %v338 = vld [vmem:[%s217 + $0xa0] sm:$0xff]
        %v339 = vld [vmem:[%s217 + $0xa8] sm:$0xff]
        %v340 = vld [vmem:[%s217 + $0xb0] sm:$0xff]
        %v341 = vld [vmem:[%s217 + $0xb8] sm:$0xff]
        %v342 = vld [vmem:[%s217 + $0xc0] sm:$0xff]
        %v343 = vld [vmem:[%s217 + $0xc8] sm:$0xff]
        %v344 = vld [vmem:[%s217 + $0xd0] sm:$0xff]
        %v345 = vld [vmem:[%s217 + $0xd8] sm:$0xff]
        %v346 = vld [vmem:[%s217 + $0xe0] sm:$0xff]
        %v347 = vld [vmem:[%s217 + $0xe8] sm:$0xff]
        %v348 = vld [vmem:[%s217 + $0xf0] sm:$0xff]
        %v349 = vld [vmem:[%s217 + $0xf8] sm:$0xff]
        %v350 = vld [vmem:[%s217 + $0x100] sm:$0xff]
        %v351 = vld [vmem:[%s217 + $0x108] sm:$0xff]
        %v352 = vld [vmem:[%s217 + $0x110] sm:$0xff]
        %v353 = vld [vmem:[%s217 + $0x118] sm:$0xff]
        %v354 = vld [vmem:[%s217 + $0x120] sm:$0xff]
        %v355 = vld [vmem:[%s217 + $0x128] sm:$0xff]
        %v356 = vld [vmem:[%s217 + $0x130] sm:$0xff]
        %v357 = vld [vmem:[%s217 + $0x138] sm:$0xff]
        %v358 = vld [vmem:[%s217 + $0x140] sm:$0xff]
        %v359 = vld [vmem:[%s217 + $0x148] sm:$0xff]
        %v360 = vld [vmem:[%s217 + $0x150] sm:$0xff]
        %v361 = vld [vmem:[%s217 + $0x158] sm:$0xff]
        %v362 = vld [vmem:[%s217 + $0x160] sm:$0xff]
        %v363 = vld [vmem:[%s217 + $0x168] sm:$0xff]
        %v364 = vld [vmem:[%s217 + $0x170] sm:$0xff]
        %v365 = vld [vmem:[%s217 + $0x178] sm:$0xff]
        %v366 = vld [vmem:[%s217 + $0x180] sm:$0xff]
        %v367 = vld [vmem:[%s217 + $0x188] sm:$0xff]
        %v368 = vld [vmem:[%s217 + $0x190] sm:$0xff]
        %v369 = vld [vmem:[%s217 + $0x198] sm:$0xff]
        %v370 = vld [vmem:[%s217 + $0x1a0] sm:$0xff]
        %v371 = vld [vmem:[%s217 + $0x1a8] sm:$0xff]
        %v372 = vld [vmem:[%s217 + $0x1b0] sm:$0xff]
        %v373 = vld [vmem:[%s217 + $0x1b8] sm:$0xff]
        %v374 = vld [vmem:[%s217 + $0x1c0] sm:$0xff]
        %v375 = vld [vmem:[%s217 + $0x1c8] sm:$0xff]
        %v376 = vld [vmem:[%s217 + $0x1d0] sm:$0xff]
        %v377 = vld [vmem:[%s217 + $0x1d8] sm:$0xff]
        %v378 = vld [vmem:[%s217 + $0x1e0] sm:$0xff]
        %v379 = vld [vmem:[%s217 + $0x1e8] sm:$0xff]
        %v380 = vld [vmem:[%s217 + $0x1f0] sm:$0xff]
        %v381 = vld [vmem:[%s217 + $0x1f8] sm:$0xff]
        %v382 = vld [vmem:[%s217 + $0x200] sm:$0xff]
        %v383 = vld [vmem:[%s217 + $0x208] sm:$0xff]
        %v384 = vld [vmem:[%s217 + $0x210] sm:$0xff]
        %v385 = vld [vmem:[%s217 + $0x218] sm:$0xff]
        %v386 = vld [vmem:[%s217 + $0x220] sm:$0xff]
        %v387 = vld [vmem:[%s217 + $0x228] sm:$0xff]
        %v388 = vld [vmem:[%s217 + $0x230] sm:$0xff]
        %v389 = vld [vmem:[%s217 + $0x238] sm:$0xff]
        %v390 = vld [vmem:[%s217 + $0x240] sm:$0xff]
        %v391 = vld [vmem:[%s217 + $0x248] sm:$0xff]
        %v392 = vld [vmem:[%s217 + $0x250] sm:$0xff]
        %v393 = vld [vmem:[%s217 + $0x258] sm:$0xff]
        %v394 = vld [vmem:[%s217 + $0x260] sm:$0xff]
        %v395 = vld [vmem:[%s217 + $0x268] sm:$0xff]
        %v396 = vld [vmem:[%s217 + $0x270] sm:$0xff]
        %v397 = vld [vmem:[%s217 + $0x278] sm:$0xff]
        %v398 = vld [vmem:[%s217 + $0x280] sm:$0xff]
        %v399 = vld [vmem:[%s217 + $0x288] sm:$0xff]
        %v400 = vld [vmem:[%s217 + $0x290] sm:$0xff]
        %v401 = vld [vmem:[%s217 + $0x298] sm:$0xff]
        %v402 = vld [vmem:[%s217 + $0x2a0] sm:$0xff]
        %v403 = vld [vmem:[%s217 + $0x2a8] sm:$0xff]
        %v404 = vld [vmem:[%s217 + $0x2b0] sm:$0xff]
        %v405 = vld [vmem:[%s217 + $0x2b8] sm:$0xff]
        %v406 = vld [vmem:[%s217 + $0x2c0] sm:$0xff]
        %v407 = vld [vmem:[%s217 + $0x2c8] sm:$0xff]
        %v408 = vld [vmem:[%s217 + $0x2d0] sm:$0xff]
        %v409 = vld [vmem:[%s217 + $0x2d8] sm:$0xff]
        %v410 = vld [vmem:[%s217 + $0x2e0] sm:$0xff]
        %v411 = vld [vmem:[%s217 + $0x2e8] sm:$0xff]
        %v412 = vld [vmem:[%s217 + $0x2f0] sm:$0xff]
        %v413 = vld [vmem:[%s217 + $0x2f8] sm:$0xff]
        %v414 = vld [vmem:[%s217 + $0x300] sm:$0xff]
        %v415 = vld [vmem:[%s217 + $0x308] sm:$0xff]
        %v416 = vld [vmem:[%s217 + $0x310] sm:$0xff]
        %v417 = vld [vmem:[%s217 + $0x318] sm:$0xff]
        %v418 = vld [vmem:[%s217 + $0x320] sm:$0xff]
        %v419 = vld [vmem:[%s217 + $0x328] sm:$0xff]
        %v420 = vld [vmem:[%s217 + $0x330] sm:$0xff]
        %v421 = vld [vmem:[%s217 + $0x338] sm:$0xff]
        %v422 = vld [vmem:[%s217 + $0x340] sm:$0xff]
        %v423 = vld [vmem:[%s217 + $0x348] sm:$0xff]
        %v424 = vld [vmem:[%s217 + $0x350] sm:$0xff]
        %v425 = vld [vmem:[%s217 + $0x358] sm:$0xff]
        %v426 = vld [vmem:[%s217 + $0x360] sm:$0xff]
        %v427 = vld [vmem:[%s217 + $0x368] sm:$0xff]
        %v428 = vld [vmem:[%s217 + $0x370] sm:$0xff]
        %v429 = vld [vmem:[%s217 + $0x378] sm:$0xff]
        %v430 = vld [vmem:[%s217 + $0x380] sm:$0xff]
        %v431 = vld [vmem:[%s217 + $0x388] sm:$0xff]
        %v432 = vld [vmem:[%s217 + $0x390] sm:$0xff]
        %v433 = vld [vmem:[%s217 + $0x398] sm:$0xff]
        %v434 = vld [vmem:[%s217 + $0x3a0] sm:$0xff]
        %v435 = vld [vmem:[%s217 + $0x3a8] sm:$0xff]
        %v436 = vld [vmem:[%s217 + $0x3b0] sm:$0xff]
        %v437 = vld [vmem:[%s217 + $0x3b8] sm:$0xff]
        %v438 = vld [vmem:[%s217 + $0x3c0] sm:$0xff]
        %v439 = vld [vmem:[%s217 + $0x3c8] sm:$0xff]
        %v440 = vld [vmem:[%s217 + $0x3d0] sm:$0xff]
        %v441 = vld [vmem:[%s217 + $0x3d8] sm:$0xff]
        %v442 = vld [vmem:[%s217 + $0x3e0] sm:$0xff]
        %v443 = vld [vmem:[%s217 + $0x3e8] sm:$0xff]
        %v444 = vld [vmem:[%s217 + $0x3f0] sm:$0xff]
        %v445 = vld [vmem:[%s217 + $0x3f8] sm:$0xff]
        %v446 = vld [vmem:[%s217 + $0x400] sm:$0xff]
        %v447 = vld [vmem:[%s217 + $0x408] sm:$0xff]
        %v448 = vld [vmem:[%s217 + $0x410] sm:$0xff]
        %v449 = vld [vmem:[%s217 + $0x418] sm:$0xff]
        %v450 = vld [vmem:[%s217 + $0x420] sm:$0xff]
        %v451 = vld [vmem:[%s217 + $0x428] sm:$0xff]
        %v452 = vld [vmem:[%s217 + $0x430] sm:$0xff]
        %v453 = vld [vmem:[%s217 + $0x438] sm:$0xff]
        %v454 = vld [vmem:[%s217 + $0x440] sm:$0xff]
        %v455 = vld [vmem:[%s217 + $0x448] sm:$0xff]
        %v456 = vld [vmem:[%s217 + $0x450] sm:$0xff]
        %v457 = vld [vmem:[%s217 + $0x458] sm:$0xff]
        %v458 = vld [vmem:[%s217 + $0x460] sm:$0xff]
        %v459 = vld [vmem:[%s217 + $0x468] sm:$0xff]
        %v460 = vld [vmem:[%s217 + $0x470] sm:$0xff]
        %v461 = vld [vmem:[%s217 + $0x478] sm:$0xff]
        %v462 = vld [vmem:[%s217 + $0x480] sm:$0xff]
        %v463 = vld [vmem:[%s217 + $0x488] sm:$0xff]
        %v464 = vld [vmem:[%s217 + $0x490] sm:$0xff]
        %v465 = vld [vmem:[%s217 + $0x498] sm:$0xff]
        %v466 = vld [vmem:[%s217 + $0x4a0] sm:$0xff]
        %v467 = vld [vmem:[%s217 + $0x4a8] sm:$0xff]
        %v468 = vld [vmem:[%s217 + $0x4b0] sm:$0xff]
        %v469 = vld [vmem:[%s217 + $0x4b8] sm:$0xff]
        %v470 = vld [vmem:[%s217 + $0x4c0] sm:$0xff]
        %v471 = vld [vmem:[%s217 + $0x4c8] sm:$0xff]
        %v472 = vld [vmem:[%s217 + $0x4d0] sm:$0xff]
        %v473 = vld [vmem:[%s217 + $0x4d8] sm:$0xff]
        %v474 = vld [vmem:[%s217 + $0x4e0] sm:$0xff]
        %v475 = vld [vmem:[%s217 + $0x4e8] sm:$0xff]
        %v476 = vld [vmem:[%s217 + $0x4f0] sm:$0xff]
        %v477 = vld [vmem:[%s217 + $0x4f8] sm:$0xff]
        %v478 = vld [vmem:[%s217 + $0x500] sm:$0xff]
        %v479 = vld [vmem:[%s217 + $0x508] sm:$0xff]
        %v480 = vld [vmem:[%s217 + $0x510] sm:$0xff]
        %v481 = vld [vmem:[%s217 + $0x518] sm:$0xff]
        %v482 = vld [vmem:[%s217 + $0x520] sm:$0xff]
        %v483 = vld [vmem:[%s217 + $0x528] sm:$0xff]
        %v484 = vld [vmem:[%s217 + $0x530] sm:$0xff]
        %v485 = vld [vmem:[%s217 + $0x538] sm:$0xff]
        %v486 = vld [vmem:[%s217 + $0x540] sm:$0xff]
        %v487 = vld [vmem:[%s217 + $0x548] sm:$0xff]
        %v488 = vld [vmem:[%s217 + $0x550] sm:$0xff]
        %v489 = vld [vmem:[%s217 + $0x558] sm:$0xff]
        %v490 = vld [vmem:[%s217 + $0x560] sm:$0xff]
        %v491 = vld [vmem:[%s217 + $0x568] sm:$0xff]
        %v492 = vld [vmem:[%s217 + $0x570] sm:$0xff]
        %v493 = vld [vmem:[%s217 + $0x578] sm:$0xff]
        %v494 = vld [vmem:[%s217 + $0x580] sm:$0xff]
        %v495 = vld [vmem:[%s217 + $0x588] sm:$0xff]
        %v496 = vld [vmem:[%s217 + $0x590] sm:$0xff]
        %v497 = vld [vmem:[%s217 + $0x598] sm:$0xff]
        %v498 = vld [vmem:[%s217 + $0x5a0] sm:$0xff]
        %v499 = vld [vmem:[%s217 + $0x5a8] sm:$0xff]
        %v500 = vld [vmem:[%s217 + $0x5b0] sm:$0xff]
        %v501 = vld [vmem:[%s217 + $0x5b8] sm:$0xff]
        %v502 = vld [vmem:[%s217 + $0x5c0] sm:$0xff]
        %v503 = vld [vmem:[%s217 + $0x5c8] sm:$0xff]
        %v504 = vld [vmem:[%s217 + $0x5d0] sm:$0xff]
        %v505 = vld [vmem:[%s217 + $0x5d8] sm:$0xff]
        %v506 = vld [vmem:[%s217 + $0x5e0] sm:$0xff]
        %v507 = vld [vmem:[%s217 + $0x5e8] sm:$0xff]
        %v508 = vld [vmem:[%s217 + $0x5f0] sm:$0xff]
        %v509 = vld [vmem:[%s217 + $0x5f8] sm:$0xff]
        %v510 = vld [vmem:[%s217 + $0x600] sm:$0xff]
        %v511 = vld [vmem:[%s217 + $0x608] sm:$0xff]
        %v512 = vld [vmem:[%s217 + $0x610] sm:$0xff]
        %v513 = vld [vmem:[%s217 + $0x618] sm:$0xff]
        %v514 = vld [vmem:[%s217 + $0x620] sm:$0xff]
        %v515 = vld [vmem:[%s217 + $0x628] sm:$0xff]
        %v516 = vld [vmem:[%s217 + $0x630] sm:$0xff]
        %v517 = vld [vmem:[%s217 + $0x638] sm:$0xff]
        %v518 = vld [vmem:[%s217 + $0x640] sm:$0xff]
        %v519 = vld [vmem:[%s217 + $0x648] sm:$0xff]
        %v520 = vld [vmem:[%s217 + $0x650] sm:$0xff]
        %v521 = vld [vmem:[%s217 + $0x658] sm:$0xff]
        %v522 = vld [vmem:[%s217 + $0x660] sm:$0xff]
        %v523 = vld [vmem:[%s217 + $0x668] sm:$0xff]
        %v524 = vld [vmem:[%s217 + $0x670] sm:$0xff]
        %v525 = vld [vmem:[%s217 + $0x678] sm:$0xff]
        %v526 = vld [vmem:[%s217 + $0x680] sm:$0xff]
        %v527 = vld [vmem:[%s217 + $0x688] sm:$0xff]
        %v528 = vld [vmem:[%s217 + $0x690] sm:$0xff]
        %v529 = vld [vmem:[%s217 + $0x698] sm:$0xff]
        %v530 = vld [vmem:[%s217 + $0x6a0] sm:$0xff]
        %v531 = vld [vmem:[%s217 + $0x6a8] sm:$0xff]
        %v532 = vld [vmem:[%s217 + $0x6b0] sm:$0xff]
        %v533 = vld [vmem:[%s217 + $0x6b8] sm:$0xff]
        %v534 = vld [vmem:[%s217 + $0x6c0] sm:$0xff]
        %v535 = vld [vmem:[%s217 + $0x6c8] sm:$0xff]
        %v536 = vld [vmem:[%s217 + $0x6d0] sm:$0xff]
        %v537 = vld [vmem:[%s217 + $0x6d8] sm:$0xff]
        %v538 = vld [vmem:[%s217 + $0x6e0] sm:$0xff]
        %v539 = vld [vmem:[%s217 + $0x6e8] sm:$0xff]
        %v540 = vld [vmem:[%s217 + $0x6f0] sm:$0xff]
        %v541 = vld [vmem:[%s217 + $0x6f8] sm:$0xff]
        %v542 = vld [vmem:[%s217 + $0x700] sm:$0xff]
        %v543 = vld [vmem:[%s217 + $0x708] sm:$0xff]
        %v544 = vld [vmem:[%s217 + $0x710] sm:$0xff]
        %v545 = vld [vmem:[%s217 + $0x718] sm:$0xff]
        %v546 = vld [vmem:[%s217 + $0x720] sm:$0xff]
        %v547 = vld [vmem:[%s217 + $0x728] sm:$0xff]
        %v548 = vld [vmem:[%s217 + $0x730] sm:$0xff]
        %v549 = vld [vmem:[%s217 + $0x738] sm:$0xff]
        %v550 = vld [vmem:[%s217 + $0x740] sm:$0xff]
        %v551 = vld [vmem:[%s217 + $0x748] sm:$0xff]
        %v552 = vld [vmem:[%s217 + $0x750] sm:$0xff]
        %v553 = vld [vmem:[%s217 + $0x758] sm:$0xff]
        %v554 = vld [vmem:[%s217 + $0x760] sm:$0xff]
        %v555 = vld [vmem:[%s217 + $0x768] sm:$0xff]
        %v556 = vld [vmem:[%s217 + $0x770] sm:$0xff]
        %v557 = vld [vmem:[%s217 + $0x778] sm:$0xff]
        %v558 = vld [vmem:[%s217 + $0x780] sm:$0xff]
        %v559 = vld [vmem:[%s217 + $0x788] sm:$0xff]
        %v560 = vld [vmem:[%s217 + $0x790] sm:$0xff]
        %v561 = vld [vmem:[%s217 + $0x798] sm:$0xff]
        %v562 = vld [vmem:[%s217 + $0x7a0] sm:$0xff]
        %v563 = vld [vmem:[%s217 + $0x7a8] sm:$0xff]
        %v564 = vld [vmem:[%s217 + $0x7b0] sm:$0xff]
        %v565 = vld [vmem:[%s217 + $0x7b8] sm:$0xff]
        %v566 = vld [vmem:[%s217 + $0x7c0] sm:$0xff]
        %v567 = vld [vmem:[%s217 + $0x7c8] sm:$0xff]
        %v568 = vld [vmem:[%s217 + $0x7d0] sm:$0xff]
        %v569 = vld [vmem:[%s217 + $0x7d8] sm:$0xff]
        %v570 = vld [vmem:[%s217 + $0x7e0] sm:$0xff]
        %v571 = vld [vmem:[%s217 + $0x7e8] sm:$0xff]
        %v572 = vld [vmem:[%s217 + $0x7f0] sm:$0xff]
        %v573 = vld [vmem:[%s217 + $0x7f8] sm:$0xff]
        %v574 = vld [vmem:[%s217 + $0x800] sm:$0xff]
        %v575 = vld [vmem:[%s217 + $0x808] sm:$0xff]
        %v576 = vld [vmem:[%s217 + $0x810] sm:$0xff]
        %v577 = vld [vmem:[%s217 + $0x818] sm:$0xff]
        %v578 = vld [vmem:[%s217 + $0x820] sm:$0xff]
        %v579 = vld [vmem:[%s217 + $0x828] sm:$0xff]
        %v580 = vld [vmem:[%s217 + $0x830] sm:$0xff]
        %v581 = vld [vmem:[%s217 + $0x838] sm:$0xff]
        %v582 = vld [vmem:[%s217 + $0x840] sm:$0xff]
        %v583 = vld [vmem:[%s217 + $0x848] sm:$0xff]
        %v584 = vld [vmem:[%s217 + $0x850] sm:$0xff]
        %v585 = vld [vmem:[%s217 + $0x858] sm:$0xff]
        %v586 = vld [vmem:[%s217 + $0x860] sm:$0xff]
        %v587 = vld [vmem:[%s217 + $0x868] sm:$0xff]
        %v588 = vld [vmem:[%s217 + $0x870] sm:$0xff]
        %v589 = vld [vmem:[%s217 + $0x878] sm:$0xff]
        %v590 = vld [vmem:[%s217 + $0x880] sm:$0xff]
        %v591 = vld [vmem:[%s217 + $0x888] sm:$0xff]
        %v592 = vld [vmem:[%s217 + $0x890] sm:$0xff]
        %v593 = vld [vmem:[%s217 + $0x898] sm:$0xff]
        %v594 = vld [vmem:[%s217 + $0x8a0] sm:$0xff]
        %v595 = vld [vmem:[%s217 + $0x8a8] sm:$0xff]
        %v596 = vld [vmem:[%s217 + $0x8b0] sm:$0xff]
        %v597 = vld [vmem:[%s217 + $0x8b8] sm:$0xff]
        %v598 = vld [vmem:[%s217 + $0x8c0] sm:$0xff]
        %v599 = vld [vmem:[%s217 + $0x8c8] sm:$0xff]
        %v600 = vld [vmem:[%s217 + $0x8d0] sm:$0xff]
        %v601 = vld [vmem:[%s217 + $0x8d8] sm:$0xff]
        %v602 = vld [vmem:[%s217 + $0x8e0] sm:$0xff]
        %v603 = vld [vmem:[%s217 + $0x8e8] sm:$0xff]
        %v604 = vld [vmem:[%s217 + $0x8f0] sm:$0xff]
        %v605 = vld [vmem:[%s217 + $0x8f8] sm:$0xff]
        %v606 = vld [vmem:[%s217 + $0x900] sm:$0xff]
        %v607 = vld [vmem:[%s217 + $0x908] sm:$0xff]
        %v608 = vld [vmem:[%s217 + $0x910] sm:$0xff]
        %v609 = vld [vmem:[%s217 + $0x918] sm:$0xff]
        %v610 = vld [vmem:[%s217 + $0x920] sm:$0xff]
        %v611 = vld [vmem:[%s217 + $0x928] sm:$0xff]
        %v612 = vld [vmem:[%s217 + $0x930] sm:$0xff]
        %v613 = vld [vmem:[%s217 + $0x938] sm:$0xff]
        %v614 = vld [vmem:[%s217 + $0x940] sm:$0xff]
        %v615 = vld [vmem:[%s217 + $0x948] sm:$0xff]
        %v616 = vld [vmem:[%s217 + $0x950] sm:$0xff]
        %v617 = vld [vmem:[%s217 + $0x958] sm:$0xff]
        %v618 = vld [vmem:[%s217 + $0x960] sm:$0xff]
        %v619 = vld [vmem:[%s217 + $0x968] sm:$0xff]
        %v620 = vld [vmem:[%s217 + $0x970] sm:$0xff]
        %v621 = vld [vmem:[%s217 + $0x978] sm:$0xff]
        %v622 = vld [vmem:[%s217 + $0x980] sm:$0xff]
        %v623 = vld [vmem:[%s217 + $0x988] sm:$0xff]
        %v624 = vld [vmem:[%s217 + $0x990] sm:$0xff]
        %v625 = vld [vmem:[%s217 + $0x998] sm:$0xff]
        %v626 = vld [vmem:[%s217 + $0x9a0] sm:$0xff]
        %v627 = vld [vmem:[%s217 + $0x9a8] sm:$0xff]
        %v628 = vld [vmem:[%s217 + $0x9b0] sm:$0xff]
        %v629 = vld [vmem:[%s217 + $0x9b8] sm:$0xff]
        %v630 = vld [vmem:[%s217 + $0x9c0] sm:$0xff]
        %v631 = vld [vmem:[%s217 + $0x9c8] sm:$0xff]
        %v632 = vld [vmem:[%s217 + $0x9d0] sm:$0xff]
        %v633 = vld [vmem:[%s217 + $0x9d8] sm:$0xff]
        %v634 = vld [vmem:[%s217 + $0x9e0] sm:$0xff]
        %v635 = vld [vmem:[%s217 + $0x9e8] sm:$0xff]
        %v636 = vld [vmem:[%s217 + $0x9f0] sm:$0xff]
        %v637 = vld [vmem:[%s217 + $0x9f8] sm:$0xff]
        %v638 = vld [vmem:[%s217 + $0xa00] sm:$0xff]
        %v639 = vld [vmem:[%s217 + $0xa08] sm:$0xff]
        %v640 = vld [vmem:[%s217 + $0xa10] sm:$0xff]
        %v641 = vld [vmem:[%s217 + $0xa18] sm:$0xff]
        %v642 = vld [vmem:[%s217 + $0xa20] sm:$0xff]
        %v643 = vld [vmem:[%s217 + $0xa28] sm:$0xff]
        %v644 = vld [vmem:[%s217 + $0xa30] sm:$0xff]
        %v645 = vld [vmem:[%s217 + $0xa38] sm:$0xff]
        %v646 = vld [vmem:[%s217 + $0xa40] sm:$0xff]
        %v647 = vld [vmem:[%s217 + $0xa48] sm:$0xff]
        %v648 = vld [vmem:[%s217 + $0xa50] sm:$0xff]
        %v649 = vld [vmem:[%s217 + $0xa58] sm:$0xff]
        %v650 = vld [vmem:[%s217 + $0xa60] sm:$0xff]
        %v651 = vld [vmem:[%s217 + $0xa68] sm:$0xff]
        %v652 = vld [vmem:[%s217 + $0xa70] sm:$0xff]
        %v653 = vld [vmem:[%s217 + $0xa78] sm:$0xff]
        %v654 = vld [vmem:[%s217 + $0xa80] sm:$0xff]
        %v655 = vld [vmem:[%s217 + $0xa88] sm:$0xff]
        %v656 = vld [vmem:[%s217 + $0xa90] sm:$0xff]
        %v657 = vld [vmem:[%s217 + $0xa98] sm:$0xff]
        %v658 = vld [vmem:[%s217 + $0xaa0] sm:$0xff]
        %v659 = vld [vmem:[%s217 + $0xaa8] sm:$0xff]
        %v660 = vld [vmem:[%s217 + $0xab0] sm:$0xff]
        %v661 = vld [vmem:[%s217 + $0xab8] sm:$0xff]
        %v662 = vld [vmem:[%s217 + $0xac0] sm:$0xff]
        %v663 = vld [vmem:[%s217 + $0xac8] sm:$0xff]
        %v664 = vld [vmem:[%s217 + $0xad0] sm:$0xff]
        %v665 = vld [vmem:[%s217 + $0xad8] sm:$0xff]
        %v666 = vld [vmem:[%s217 + $0xae0] sm:$0xff]
        %v667 = vld [vmem:[%s217 + $0xae8] sm:$0xff]
        %v668 = vld [vmem:[%s217 + $0xaf0] sm:$0xff]
        %v669 = vld [vmem:[%s217 + $0xaf8] sm:$0xff]
        %v670 = vld [vmem:[%s217 + $0xb00] sm:$0xff]
        %v671 = vld [vmem:[%s217 + $0xb08] sm:$0xff]
        %v672 = vld [vmem:[%s217 + $0xb10] sm:$0xff]
        %v673 = vld [vmem:[%s217 + $0xb18] sm:$0xff]
        %v674 = vld [vmem:[%s217 + $0xb20] sm:$0xff]
        %v675 = vld [vmem:[%s217 + $0xb28] sm:$0xff]
        %v676 = vld [vmem:[%s217 + $0xb30] sm:$0xff]
        %v677 = vld [vmem:[%s217 + $0xb38] sm:$0xff]
        %v678 = vld [vmem:[%s217 + $0xb40] sm:$0xff]
        %v679 = vld [vmem:[%s217 + $0xb48] sm:$0xff]
        %v680 = vld [vmem:[%s217 + $0xb50] sm:$0xff]
        %v681 = vld [vmem:[%s217 + $0xb58] sm:$0xff]
        %v682 = vld [vmem:[%s217 + $0xb60] sm:$0xff]
        %v683 = vld [vmem:[%s217 + $0xb68] sm:$0xff]
        %v684 = vld [vmem:[%s217 + $0xb70] sm:$0xff]
        %v685 = vld [vmem:[%s217 + $0xb78] sm:$0xff]
        %v686 = vld [vmem:[%s217 + $0xb80] sm:$0xff]
        %v687 = vld [vmem:[%s217 + $0xb88] sm:$0xff]
        %v688 = vld [vmem:[%s217 + $0xb90] sm:$0xff]
        %v689 = vld [vmem:[%s217 + $0xb98] sm:$0xff]
        %v690 = vld [vmem:[%s217 + $0xba0] sm:$0xff]
        %v691 = vld [vmem:[%s217 + $0xba8] sm:$0xff]
        %v692 = vld [vmem:[%s217 + $0xbb0] sm:$0xff]
        %v693 = vld [vmem:[%s217 + $0xbb8] sm:$0xff]
        %v694 = vld [vmem:[%s217 + $0xbc0] sm:$0xff]
        %v695 = vld [vmem:[%s217 + $0xbc8] sm:$0xff]
        %v696 = vld [vmem:[%s217 + $0xbd0] sm:$0xff]
        %v697 = vld [vmem:[%s217 + $0xbd8] sm:$0xff]
        %v698 = vld [vmem:[%s217 + $0xbe0] sm:$0xff]
        %v699 = vld [vmem:[%s217 + $0xbe8] sm:$0xff]
        %v700 = vld [vmem:[%s217 + $0xbf0] sm:$0xff]
        %v701 = vld [vmem:[%s217 + $0xbf8] sm:$0xff]
        %v702 = vld [vmem:[%s217 + $0xc00] sm:$0xff]
        %v703 = vld [vmem:[%s217 + $0xc08] sm:$0xff]
        %v704 = vld [vmem:[%s217 + $0xc10] sm:$0xff]
        %v705 = vld [vmem:[%s217 + $0xc18] sm:$0xff]
        %v706 = vld [vmem:[%s217 + $0xc20] sm:$0xff]
        %v707 = vld [vmem:[%s217 + $0xc28] sm:$0xff]
        %v708 = vld [vmem:[%s217 + $0xc30] sm:$0xff]
        %v709 = vld [vmem:[%s217 + $0xc38] sm:$0xff]
        %v710 = vld [vmem:[%s217 + $0xc40] sm:$0xff]
        %v711 = vld [vmem:[%s217 + $0xc48] sm:$0xff]
        %v712 = vld [vmem:[%s217 + $0xc50] sm:$0xff]
        %v713 = vld [vmem:[%s217 + $0xc58] sm:$0xff]
        %v714 = vld [vmem:[%s217 + $0xc60] sm:$0xff]
        %v715 = vld [vmem:[%s217 + $0xc68] sm:$0xff]
        %v716 = vld [vmem:[%s217 + $0xc70] sm:$0xff]
        %v717 = vld [vmem:[%s217 + $0xc78] sm:$0xff]
        %v718 = vld [vmem:[%s217 + $0xc80] sm:$0xff]
        %v719 = vld [vmem:[%s217 + $0xc88] sm:$0xff]
        %v720 = vld [vmem:[%s217 + $0xc90] sm:$0xff]
        %v721 = vld [vmem:[%s217 + $0xc98] sm:$0xff]
        %v722 = vld [vmem:[%s217 + $0xca0] sm:$0xff]
        %v723 = vld [vmem:[%s217 + $0xca8] sm:$0xff]
        %v724 = vld [vmem:[%s217 + $0xcb0] sm:$0xff]
        %v725 = vld [vmem:[%s217 + $0xcb8] sm:$0xff]
        %v726 = vld [vmem:[%s217 + $0xcc0] sm:$0xff]
        %v727 = vld [vmem:[%s217 + $0xcc8] sm:$0xff]
        %v728 = vld [vmem:[%s217 + $0xcd0] sm:$0xff]
        %v729 = vld [vmem:[%s217 + $0xcd8] sm:$0xff]
        %v730 = vld [vmem:[%s217 + $0xce0] sm:$0xff]
        %v731 = vld [vmem:[%s217 + $0xce8] sm:$0xff]
        %v732 = vld [vmem:[%s217 + $0xcf0] sm:$0xff]
        %v733 = vld [vmem:[%s217 + $0xcf8] sm:$0xff]
        %v734 = vld [vmem:[%s217 + $0xd00] sm:$0xff]
        %v735 = vld [vmem:[%s217 + $0xd08] sm:$0xff]
        %v736 = vld [vmem:[%s217 + $0xd10] sm:$0xff]
        %v737 = vld [vmem:[%s217 + $0xd18] sm:$0xff]
        %v738 = vld [vmem:[%s217 + $0xd20] sm:$0xff]
        %v739 = vld [vmem:[%s217 + $0xd28] sm:$0xff]
        %v740 = vld [vmem:[%s217 + $0xd30] sm:$0xff]
        %v741 = vld [vmem:[%s217 + $0xd38] sm:$0xff]
        %v742 = vld [vmem:[%s217 + $0xd40] sm:$0xff]
        %v743 = vld [vmem:[%s217 + $0xd48] sm:$0xff]
        %v744 = vld [vmem:[%s217 + $0xd50] sm:$0xff]
        %v745 = vld [vmem:[%s217 + $0xd58] sm:$0xff]
        %v746 = vld [vmem:[%s217 + $0xd60] sm:$0xff]
        %v747 = vld [vmem:[%s217 + $0xd68] sm:$0xff]
        %v748 = vld [vmem:[%s217 + $0xd70] sm:$0xff]
        %v749 = vld [vmem:[%s217 + $0xd78] sm:$0xff]
        %v750 = vld [vmem:[%s217 + $0xd80] sm:$0xff]
        %v751 = vld [vmem:[%s217 + $0xd88] sm:$0xff]
        %v752 = vld [vmem:[%s217 + $0xd90] sm:$0xff]
        %v753 = vld [vmem:[%s217 + $0xd98] sm:$0xff]
        %v754 = vld [vmem:[%s217 + $0xda0] sm:$0xff]
        %v755 = vld [vmem:[%s217 + $0xda8] sm:$0xff]
        %v756 = vld [vmem:[%s217 + $0xdb0] sm:$0xff]
        %v757 = vld [vmem:[%s217 + $0xdb8] sm:$0xff]
        %v758 = vld [vmem:[%s217 + $0xdc0] sm:$0xff]
        %v759 = vld [vmem:[%s217 + $0xdc8] sm:$0xff]
        %v760 = vld [vmem:[%s217 + $0xdd0] sm:$0xff]
        %v761 = vld [vmem:[%s217 + $0xdd8] sm:$0xff]
        %v762 = vld [vmem:[%s217 + $0xde0] sm:$0xff]
        %v763 = vld [vmem:[%s217 + $0xde8] sm:$0xff]
        %v764 = vld [vmem:[%s217 + $0xdf0] sm:$0xff]
        %v765 = vld [vmem:[%s217 + $0xdf8] sm:$0xff]
        %v766 = vld [vmem:[%s217 + $0xe00] sm:$0xff]
        %v767 = vld [vmem:[%s217 + $0xe08] sm:$0xff]
        %v768 = vld [vmem:[%s217 + $0xe10] sm:$0xff]
        %v769 = vld [vmem:[%s217 + $0xe18] sm:$0xff]
        %v770 = vld [vmem:[%s217 + $0xe20] sm:$0xff]
        %v771 = vld [vmem:[%s217 + $0xe28] sm:$0xff]
        %v772 = vld [vmem:[%s217 + $0xe30] sm:$0xff]
        %v773 = vld [vmem:[%s217 + $0xe38] sm:$0xff]
        %v774 = vld [vmem:[%s217 + $0xe40] sm:$0xff]
        %v775 = vld [vmem:[%s217 + $0xe48] sm:$0xff]
        %v776 = vld [vmem:[%s217 + $0xe50] sm:$0xff]
        %v777 = vld [vmem:[%s217 + $0xe58] sm:$0xff]
        %v778 = vld [vmem:[%s217 + $0xe60] sm:$0xff]
        %v779 = vld [vmem:[%s217 + $0xe68] sm:$0xff]
        %v780 = vld [vmem:[%s217 + $0xe70] sm:$0xff]
        %v781 = vld [vmem:[%s217 + $0xe78] sm:$0xff]
        %v782 = vld [vmem:[%s217 + $0xe80] sm:$0xff]
        %v783 = vld [vmem:[%s217 + $0xe88] sm:$0xff]
        %v784 = vld [vmem:[%s217 + $0xe90] sm:$0xff]
        %v785 = vld [vmem:[%s217 + $0xe98] sm:$0xff]
        %v786 = vld [vmem:[%s217 + $0xea0] sm:$0xff]
        %v787 = vld [vmem:[%s217 + $0xea8] sm:$0xff]
        %v788 = vld [vmem:[%s217 + $0xeb0] sm:$0xff]
        %v789 = vld [vmem:[%s217 + $0xeb8] sm:$0xff]
        %v790 = vld [vmem:[%s217 + $0xec0] sm:$0xff]
        %v791 = vld [vmem:[%s217 + $0xec8] sm:$0xff]
        %v792 = vld [vmem:[%s217 + $0xed0] sm:$0xff]
        %v793 = vld [vmem:[%s217 + $0xed8] sm:$0xff]
        %v794 = vld [vmem:[%s217 + $0xee0] sm:$0xff]
        %v795 = vld [vmem:[%s217 + $0xee8] sm:$0xff]
        %v796 = vld [vmem:[%s217 + $0xef0] sm:$0xff]
        %v797 = vld [vmem:[%s217 + $0xef8] sm:$0xff]
        %v798 = vld [vmem:[%s217 + $0xf00] sm:$0xff]
        %v799 = vld [vmem:[%s217 + $0xf08] sm:$0xff]
        %v800 = vld [vmem:[%s217 + $0xf10] sm:$0xff]
        %v801 = vld [vmem:[%s217 + $0xf18] sm:$0xff]
        %v802 = vld [vmem:[%s217 + $0xf20] sm:$0xff]
        %v803 = vld [vmem:[%s217 + $0xf28] sm:$0xff]
        %v804 = vld [vmem:[%s217 + $0xf30] sm:$0xff]
        %v805 = vld [vmem:[%s217 + $0xf38] sm:$0xff]
        %v806 = vld [vmem:[%s217 + $0xf40] sm:$0xff]
        %v807 = vld [vmem:[%s217 + $0xf48] sm:$0xff]
        %v808 = vld [vmem:[%s217 + $0xf50] sm:$0xff]
        %v809 = vld [vmem:[%s217 + $0xf58] sm:$0xff]
        %v810 = vld [vmem:[%s217 + $0xf60] sm:$0xff]
        %v811 = vld [vmem:[%s217 + $0xf68] sm:$0xff]
        %v812 = vld [vmem:[%s217 + $0xf70] sm:$0xff]
        %v813 = vld [vmem:[%s217 + $0xf78] sm:$0xff]
        %v814 = vld [vmem:[%s217 + $0xf80] sm:$0xff]
        %v815 = vld [vmem:[%s217 + $0xf88] sm:$0xff]
        %v816 = vld [vmem:[%s217 + $0xf90] sm:$0xff]
        %v817 = vld [vmem:[%s217 + $0xf98] sm:$0xff]
        %v818 = vld [vmem:[%s217 + $0xfa0] sm:$0xff]
        %v819 = vld [vmem:[%s217 + $0xfa8] sm:$0xff]
        %v820 = vld [vmem:[%s217 + $0xfb0] sm:$0xff]
        %v821 = vld [vmem:[%s217 + $0xfb8] sm:$0xff]
        %v822 = vld [vmem:[%s217 + $0xfc0] sm:$0xff]
        %v823 = vld [vmem:[%s217 + $0xfc8] sm:$0xff]
        %v824 = vld [vmem:[%s217 + $0xfd0] sm:$0xff]
        %v825 = vld [vmem:[%s217 + $0xfd8] sm:$0xff]
        %v826 = vld [vmem:[%s217 + $0xfe0] sm:$0xff]
        %v827 = vld [vmem:[%s217 + $0xfe8] sm:$0xff]
        %v828 = vld [vmem:[%s217 + $0xff0] sm:$0xff]
        %v829 = vld [vmem:[%s217 + $0xff8] sm:$0xff]
        %830 = vmatprep.subr.mxu0 %v319
        %831 = vmatpush1.xpose.msra.mxu0 %v318
        %832 = vmatprep.subr.mxu0 %v327
        %833 = vmatpush1.xpose.msra.mxu0 %v326
        %834 = vmatprep.subr.mxu0 %v335
        %835 = vmatpush1.xpose.msra.mxu0 %v334
        %836 = vmatprep.subr.mxu0 %v343
        %837 = vmatpush1.xpose.msra.mxu0 %v342
        %838 = vmatprep.subr.mxu0 %v351
        %839 = vmatpush1.xpose.msra.mxu0 %v350
        %840 = vmatprep.subr.mxu0 %v359
        %841 = vmatpush1.xpose.msra.mxu0 %v358
        %842 = vmatprep.subr.mxu0 %v367
        %843 = vmatpush1.xpose.msra.mxu0 %v366
        %844 = vmatprep.subr.mxu0 %v375
        %845 = vmatpush1.xpose.msra.mxu0 %v374
        %846 = vmatprep.subr.mxu0 %v383
        %847 = vmatpush1.xpose.msra.mxu0 %v382
        %848 = vmatprep.subr.mxu0 %v391
        %849 = vmatpush1.xpose.msra.mxu0 %v390
        %850 = vmatprep.subr.mxu0 %v399
        %851 = vmatpush1.xpose.msra.mxu0 %v398
        %852 = vmatprep.subr.mxu0 %v407
        %853 = vmatpush1.xpose.msra.mxu0 %v406
        %854 = vmatprep.subr.mxu0 %v415
        %855 = vmatpush1.xpose.msra.mxu0 %v414
        %856 = vmatprep.subr.mxu0 %v423
        %857 = vmatpush1.xpose.msra.mxu0 %v422
        %858 = vmatprep.subr.mxu0 %v431
        %859 = vmatpush1.xpose.msra.mxu0 %v430
        %860 = vmatprep.subr.mxu0 %v439
        %861 = vmatpush1.xpose.msra.mxu0 %v438
        %862 = vmatprep.subr.mxu0 %v447
        %863 = vmatpush1.xpose.msra.mxu0 %v446
        %864 = vmatprep.subr.mxu0 %v455
        %865 = vmatpush1.xpose.msra.mxu0 %v454
        %866 = vmatprep.subr.mxu0 %v463
        %867 = vmatpush1.xpose.msra.mxu0 %v462
        %868 = vmatprep.subr.mxu0 %v471
        %869 = vmatpush1.xpose.msra.mxu0 %v470
        %870 = vmatprep.subr.mxu0 %v479
        %871 = vmatpush1.xpose.msra.mxu0 %v478
        %872 = vmatprep.subr.mxu0 %v487
        %873 = vmatpush1.xpose.msra.mxu0 %v486
        %874 = vmatprep.subr.mxu0 %v495
        %875 = vmatpush1.xpose.msra.mxu0 %v494
        %876 = vmatprep.subr.mxu0 %v503
        %877 = vmatpush1.xpose.msra.mxu0 %v502
        %878 = vmatprep.subr.mxu0 %v511
        %879 = vmatpush1.xpose.msra.mxu0 %v510
        %880 = vmatprep.subr.mxu0 %v519
        %881 = vmatpush1.xpose.msra.mxu0 %v518
        %882 = vmatprep.subr.mxu0 %v527
        %883 = vmatpush1.xpose.msra.mxu0 %v526
        %884 = vmatprep.subr.mxu0 %v535
        %885 = vmatpush1.xpose.msra.mxu0 %v534
        %886 = vmatprep.subr.mxu0 %v543
        %887 = vmatpush1.xpose.msra.mxu0 %v542
        %888 = vmatprep.subr.mxu0 %v551
        %889 = vmatpush1.xpose.msra.mxu0 %v550
        %890 = vmatprep.subr.mxu0 %v559
        %891 = vmatpush1.xpose.msra.mxu0 %v558
        %892 = vmatprep.subr.mxu0 %v567
        %893 = vmatpush1.xpose.msra.mxu0 %v566
        %894 = vmatprep.mubr.f32.mxu0 %v311
        %895 = vmatmul.mubr.f32.gmra.mrb[0].mxu0 %v310
        %v896 = vpop.f32.mrb[0].mxu0
        %v897 = vadd.f32 0.0, %v896
        %v898 = vpop.f32.mrb[0].mxu0
        %v899 = vadd.f32 0.0, %v898
        %900 = vdwg.mxu0
        %901 = vmatprep.subr.mxu0 %v321
        %902 = vmatpush1.xpose.msra.mxu0 %v320
        %903 = vmatprep.subr.mxu0 %v329
        %904 = vmatpush1.xpose.msra.mxu0 %v328
        %905 = vmatprep.subr.mxu0 %v337
        %906 = vmatpush1.xpose.msra.mxu0 %v336
        %907 = vmatprep.subr.mxu0 %v345
        %908 = vmatpush1.xpose.msra.mxu0 %v344
        %909 = vmatprep.subr.mxu0 %v353
        %910 = vmatpush1.xpose.msra.mxu0 %v352
        %911 = vmatprep.subr.mxu0 %v361
        %912 = vmatpush1.xpose.msra.mxu0 %v360
        %913 = vmatprep.subr.mxu0 %v369
        %914 = vmatpush1.xpose.msra.mxu0 %v368
        %915 = vmatprep.subr.mxu0 %v377
        %916 = vmatpush1.xpose.msra.mxu0 %v376
        %917 = vmatprep.subr.mxu0 %v385
        %918 = vmatpush1.xpose.msra.mxu0 %v384
        %919 = vmatprep.subr.mxu0 %v393
        %920 = vmatpush1.xpose.msra.mxu0 %v392
        %921 = vmatprep.subr.mxu0 %v401
        %922 = vmatpush1.xpose.msra.mxu0 %v400
        %923 = vmatprep.subr.mxu0 %v409
        %924 = vmatpush1.xpose.msra.mxu0 %v408
        %925 = vmatprep.subr.mxu0 %v417
        %926 = vmatpush1.xpose.msra.mxu0 %v416
        %927 = vmatprep.subr.mxu0 %v425
        %928 = vmatpush1.xpose.msra.mxu0 %v424
        %929 = vmatprep.subr.mxu0 %v433
        %930 = vmatpush1.xpose.msra.mxu0 %v432
        %931 = vmatprep.subr.mxu0 %v441
        %932 = vmatpush1.xpose.msra.mxu0 %v440
        %933 = vmatprep.subr.mxu0 %v449
        %934 = vmatpush1.xpose.msra.mxu0 %v448
        %935 = vmatprep.subr.mxu0 %v457
        %936 = vmatpush1.xpose.msra.mxu0 %v456
        %937 = vmatprep.subr.mxu0 %v465
        %938 = vmatpush1.xpose.msra.mxu0 %v464
        %939 = vmatprep.subr.mxu0 %v473
        %940 = vmatpush1.xpose.msra.mxu0 %v472
        %941 = vmatprep.subr.mxu0 %v481
        %942 = vmatpush1.xpose.msra.mxu0 %v480
        %943 = vmatprep.subr.mxu0 %v489
        %944 = vmatpush1.xpose.msra.mxu0 %v488
        %945 = vmatprep.subr.mxu0 %v497
        %946 = vmatpush1.xpose.msra.mxu0 %v496
        %947 = vmatprep.subr.mxu0 %v505
        %948 = vmatpush1.xpose.msra.mxu0 %v504
        %949 = vmatprep.subr.mxu0 %v513
        %950 = vmatpush1.xpose.msra.mxu0 %v512
        %951 = vmatprep.subr.mxu0 %v521
        %952 = vmatpush1.xpose.msra.mxu0 %v520
        %953 = vmatprep.subr.mxu0 %v529
        %954 = vmatpush1.xpose.msra.mxu0 %v528
        %955 = vmatprep.subr.mxu0 %v537
        %956 = vmatpush1.xpose.msra.mxu0 %v536
        %957 = vmatprep.subr.mxu0 %v545
        %958 = vmatpush1.xpose.msra.mxu0 %v544
        %959 = vmatprep.subr.mxu0 %v553
        %960 = vmatpush1.xpose.msra.mxu0 %v552
        %961 = vmatprep.subr.mxu0 %v561
        %962 = vmatpush1.xpose.msra.mxu0 %v560
        %963 = vmatprep.subr.mxu0 %v569
        %964 = vmatpush1.xpose.msra.mxu0 %v568
        %965 = vmatprep.mubr.f32.mxu0 %v313
        %966 = vmatmul.mubr.f32.gmra.mrb[0].mxu0 %v312
        %v967 = vpop.f32.mrb[0].mxu0
        %v968 = vadd.f32 %v897, %v967
        %v969 = vpop.f32.mrb[0].mxu0
        %v970 = vadd.f32 %v899, %v969
        %971 = vdwg.mxu0
        %972 = vmatprep.subr.mxu0 %v323
        %973 = vmatpush1.xpose.msra.mxu0 %v322
        %974 = vmatprep.subr.mxu0 %v331
        %975 = vmatpush1.xpose.msra.mxu0 %v330
        %976 = vmatprep.subr.mxu0 %v339
        %977 = vmatpush1.xpose.msra.mxu0 %v338
        %978 = vmatprep.subr.mxu0 %v347
        %979 = vmatpush1.xpose.msra.mxu0 %v346
        %980 = vmatprep.subr.mxu0 %v355
        %981 = vmatpush1.xpose.msra.mxu0 %v354
        %982 = vmatprep.subr.mxu0 %v363
        %983 = vmatpush1.xpose.msra.mxu0 %v362
        %984 = vmatprep.subr.mxu0 %v371
        %985 = vmatpush1.xpose.msra.mxu0 %v370
        %986 = vmatprep.subr.mxu0 %v379
        %987 = vmatpush1.xpose.msra.mxu0 %v378
        %988 = vmatprep.subr.mxu0 %v387
        %989 = vmatpush1.xpose.msra.mxu0 %v386
        %990 = vmatprep.subr.mxu0 %v395
        %991 = vmatpush1.xpose.msra.mxu0 %v394
        %992 = vmatprep.subr.mxu0 %v403
        %993 = vmatpush1.xpose.msra.mxu0 %v402
        %994 = vmatprep.subr.mxu0 %v411
        %995 = vmatpush1.xpose.msra.mxu0 %v410
        %996 = vmatprep.subr.mxu0 %v419
        %997 = vmatpush1.xpose.msra.mxu0 %v418
        %998 = vmatprep.subr.mxu0 %v427
        %999 = vmatpush1.xpose.msra.mxu0 %v426
        %1000 = vmatprep.subr.mxu0 %v435
        %1001 = vmatpush1.xpose.msra.mxu0 %v434
        %1002 = vmatprep.subr.mxu0 %v443
        %1003 = vmatpush1.xpose.msra.mxu0 %v442
        %1004 = vmatprep.subr.mxu0 %v451
        %1005 = vmatpush1.xpose.msra.mxu0 %v450
        %1006 = vmatprep.subr.mxu0 %v459
        %1007 = vmatpush1.xpose.msra.mxu0 %v458
        %1008 = vmatprep.subr.mxu0 %v467
        %1009 = vmatpush1.xpose.msra.mxu0 %v466
        %1010 = vmatprep.subr.mxu0 %v475
        %1011 = vmatpush1.xpose.msra.mxu0 %v474
        %1012 = vmatprep.subr.mxu0 %v483
        %1013 = vmatpush1.xpose.msra.mxu0 %v482
        %1014 = vmatprep.subr.mxu0 %v491
        %1015 = vmatpush1.xpose.msra.mxu0 %v490
        %1016 = vmatprep.subr.mxu0 %v499
        %1017 = vmatpush1.xpose.msra.mxu0 %v498
        %1018 = vmatprep.subr.mxu0 %v507
        %1019 = vmatpush1.xpose.msra.mxu0 %v506
        %1020 = vmatprep.subr.mxu0 %v515
        %1021 = vmatpush1.xpose.msra.mxu0 %v514
        %1022 = vmatprep.subr.mxu0 %v523
        %1023 = vmatpush1.xpose.msra.mxu0 %v522
        %1024 = vmatprep.subr.mxu0 %v531
        %1025 = vmatpush1.xpose.msra.mxu0 %v530
        %1026 = vmatprep.subr.mxu0 %v539
        %1027 = vmatpush1.xpose.msra.mxu0 %v538
        %1028 = vmatprep.subr.mxu0 %v547
        %1029 = vmatpush1.xpose.msra.mxu0 %v546
        %1030 = vmatprep.subr.mxu0 %v555
        %1031 = vmatpush1.xpose.msra.mxu0 %v554
        %1032 = vmatprep.subr.mxu0 %v563
        %1033 = vmatpush1.xpose.msra.mxu0 %v562
        %1034 = vmatprep.subr.mxu0 %v571
        %1035 = vmatpush1.xpose.msra.mxu0 %v570
        %1036 = vmatprep.mubr.f32.mxu0 %v315
        %1037 = vmatmul.mubr.f32.gmra.mrb[0].mxu0 %v314
        %v1038 = vpop.f32.mrb[0].mxu0
        %v1039 = vadd.f32 %v968, %v1038
        %v1040 = vpop.f32.mrb[0].mxu0
        %v1041 = vadd.f32 %v970, %v1040
        %1042 = vdwg.mxu0
        %1043 = vmatprep.subr.mxu0 %v325
        %1044 = vmatpush1.xpose.msra.mxu0 %v324
        %1045 = vmatprep.subr.mxu0 %v333
        %1046 = vmatpush1.xpose.msra.mxu0 %v332
        %1047 = vmatprep.subr.mxu0 %v341
        %1048 = vmatpush1.xpose.msra.mxu0 %v340
        %1049 = vmatprep.subr.mxu0 %v349
        %1050 = vmatpush1.xpose.msra.mxu0 %v348
        %1051 = vmatprep.subr.mxu0 %v357
        %1052 = vmatpush1.xpose.msra.mxu0 %v356
        %1053 = vmatprep.subr.mxu0 %v365
        %1054 = vmatpush1.xpose.msra.mxu0 %v364
        %1055 = vmatprep.subr.mxu0 %v373
        %1056 = vmatpush1.xpose.msra.mxu0 %v372
        %1057 = vmatprep.subr.mxu0 %v381
        %1058 = vmatpush1.xpose.msra.mxu0 %v380
        %1059 = vmatprep.subr.mxu0 %v389
        %1060 = vmatpush1.xpose.msra.mxu0 %v388
        %1061 = vmatprep.subr.mxu0 %v397
        %1062 = vmatpush1.xpose.msra.mxu0 %v396
        %1063 = vmatprep.subr.mxu0 %v405
        %1064 = vmatpush1.xpose.msra.mxu0 %v404
        %1065 = vmatprep.subr.mxu0 %v413
        %1066 = vmatpush1.xpose.msra.mxu0 %v412
        %1067 = vmatprep.subr.mxu0 %v421
        %1068 = vmatpush1.xpose.msra.mxu0 %v420
        %1069 = vmatprep.subr.mxu0 %v429
        %1070 = vmatpush1.xpose.msra.mxu0 %v428
        %1071 = vmatprep.subr.mxu0 %v437
        %1072 = vmatpush1.xpose.msra.mxu0 %v436
        %1073 = vmatprep.subr.mxu0 %v445
        %1074 = vmatpush1.xpose.msra.mxu0 %v444
        %1075 = vmatprep.subr.mxu0 %v453
        %1076 = vmatpush1.xpose.msra.mxu0 %v452
        %1077 = vmatprep.subr.mxu0 %v461
        %1078 = vmatpush1.xpose.msra.mxu0 %v460
        %1079 = vmatprep.subr.mxu0 %v469
        %1080 = vmatpush1.xpose.msra.mxu0 %v468
        %1081 = vmatprep.subr.mxu0 %v477
        %1082 = vmatpush1.xpose.msra.mxu0 %v476
        %1083 = vmatprep.subr.mxu0 %v485
        %1084 = vmatpush1.xpose.msra.mxu0 %v484
        %1085 = vmatprep.subr.mxu0 %v493
        %1086 = vmatpush1.xpose.msra.mxu0 %v492
        %1087 = vmatprep.subr.mxu0 %v501
        %1088 = vmatpush1.xpose.msra.mxu0 %v500
        %1089 = vmatprep.subr.mxu0 %v509
        %1090 = vmatpush1.xpose.msra.mxu0 %v508
        %1091 = vmatprep.subr.mxu0 %v517
        %1092 = vmatpush1.xpose.msra.mxu0 %v516
        %1093 = vmatprep.subr.mxu0 %v525
        %1094 = vmatpush1.xpose.msra.mxu0 %v524
        %1095 = vmatprep.subr.mxu0 %v533
        %1096 = vmatpush1.xpose.msra.mxu0 %v532
        %1097 = vmatprep.subr.mxu0 %v541
        %1098 = vmatpush1.xpose.msra.mxu0 %v540
        %1099 = vmatprep.subr.mxu0 %v549
        %1100 = vmatpush1.xpose.msra.mxu0 %v548
        %1101 = vmatprep.subr.mxu0 %v557
        %1102 = vmatpush1.xpose.msra.mxu0 %v556
        %1103 = vmatprep.subr.mxu0 %v565
        %1104 = vmatpush1.xpose.msra.mxu0 %v564
        %1105 = vmatprep.subr.mxu0 %v573
        %1106 = vmatpush1.xpose.msra.mxu0 %v572
        %1107 = vmatprep.mubr.f32.mxu0 %v317
        %1108 = vmatmul.mubr.f32.gmra.mrb[0].mxu0 %v316
        %v1109 = vpop.f32.mrb[0].mxu0
        %v1110 = vadd.f32 %v1039, %v1109
        %v1111 = vpop.f32.mrb[0].mxu0
        %v1112 = vadd.f32 %v1041, %v1111
        %1113 = vdwg.mxu0
        %1114 = vmatprep.subr.mxu0 %v575
        %1115 = vmatpush1.xpose.msra.mxu0 %v574
        %1116 = vmatprep.subr.mxu0 %v583
        %1117 = vmatpush1.xpose.msra.mxu0 %v582
        %1118 = vmatprep.subr.mxu0 %v591
        %1119 = vmatpush1.xpose.msra.mxu0 %v590
        %1120 = vmatprep.subr.mxu0 %v599
        %1121 = vmatpush1.xpose.msra.mxu0 %v598
        %1122 = vmatprep.subr.mxu0 %v607
        %1123 = vmatpush1.xpose.msra.mxu0 %v606
        %1124 = vmatprep.subr.mxu0 %v615
        %1125 = vmatpush1.xpose.msra.mxu0 %v614
        %1126 = vmatprep.subr.mxu0 %v623
        %1127 = vmatpush1.xpose.msra.mxu0 %v622
        %1128 = vmatprep.subr.mxu0 %v631
        %1129 = vmatpush1.xpose.msra.mxu0 %v630
        %1130 = vmatprep.subr.mxu0 %v639
        %1131 = vmatpush1.xpose.msra.mxu0 %v638
        %1132 = vmatprep.subr.mxu0 %v647
        %1133 = vmatpush1.xpose.msra.mxu0 %v646
        %1134 = vmatprep.subr.mxu0 %v655
        %1135 = vmatpush1.xpose.msra.mxu0 %v654
        %1136 = vmatprep.subr.mxu0 %v663
        %1137 = vmatpush1.xpose.msra.mxu0 %v662
        %1138 = vmatprep.subr.mxu0 %v671
        %1139 = vmatpush1.xpose.msra.mxu0 %v670
        %1140 = vmatprep.subr.mxu0 %v679
        %1141 = vmatpush1.xpose.msra.mxu0 %v678
        %1142 = vmatprep.subr.mxu0 %v687
        %1143 = vmatpush1.xpose.msra.mxu0 %v686
        %1144 = vmatprep.subr.mxu0 %v695
        %1145 = vmatpush1.xpose.msra.mxu0 %v694
        %1146 = vmatprep.subr.mxu0 %v703
        %1147 = vmatpush1.xpose.msra.mxu0 %v702
        %1148 = vmatprep.subr.mxu0 %v711
        %1149 = vmatpush1.xpose.msra.mxu0 %v710
        %1150 = vmatprep.subr.mxu0 %v719
        %1151 = vmatpush1.xpose.msra.mxu0 %v718
        %1152 = vmatprep.subr.mxu0 %v727
        %1153 = vmatpush1.xpose.msra.mxu0 %v726
        %1154 = vmatprep.subr.mxu0 %v735
        %1155 = vmatpush1.xpose.msra.mxu0 %v734
        %1156 = vmatprep.subr.mxu0 %v743
        %1157 = vmatpush1.xpose.msra.mxu0 %v742
        %1158 = vmatprep.subr.mxu0 %v751
        %1159 = vmatpush1.xpose.msra.mxu0 %v750
        %1160 = vmatprep.subr.mxu0 %v759
        %1161 = vmatpush1.xpose.msra.mxu0 %v758
        %1162 = vmatprep.subr.mxu0 %v767
        %1163 = vmatpush1.xpose.msra.mxu0 %v766
        %1164 = vmatprep.subr.mxu0 %v775
        %1165 = vmatpush1.xpose.msra.mxu0 %v774
        %1166 = vmatprep.subr.mxu0 %v783
        %1167 = vmatpush1.xpose.msra.mxu0 %v782
        %1168 = vmatprep.subr.mxu0 %v791
        %1169 = vmatpush1.xpose.msra.mxu0 %v790
        %1170 = vmatprep.subr.mxu0 %v799
        %1171 = vmatpush1.xpose.msra.mxu0 %v798
        %1172 = vmatprep.subr.mxu0 %v807
        %1173 = vmatpush1.xpose.msra.mxu0 %v806
        %1174 = vmatprep.subr.mxu0 %v815
        %1175 = vmatpush1.xpose.msra.mxu0 %v814
        %1176 = vmatprep.subr.mxu0 %v823
        %1177 = vmatpush1.xpose.msra.mxu0 %v822
        %1178 = vmatprep.mubr.f32.mxu0 %v311
        %1179 = vmatmul.mubr.f32.gmra.mrb[0].mxu0 %v310
        %v1180 = vpop.f32.mrb[0].mxu0
        %v1181 = vadd.f32 0.0, %v1180
        %v1182 = vpop.f32.mrb[0].mxu0
        %v1183 = vadd.f32 0.0, %v1182
        %1184 = vdwg.mxu0
        %1185 = vmatprep.subr.mxu0 %v577
        %1186 = vmatpush1.xpose.msra.mxu0 %v576
        %1187 = vmatprep.subr.mxu0 %v585
        %1188 = vmatpush1.xpose.msra.mxu0 %v584
        %1189 = vmatprep.subr.mxu0 %v593
        %1190 = vmatpush1.xpose.msra.mxu0 %v592
        %1191 = vmatprep.subr.mxu0 %v601
        %1192 = vmatpush1.xpose.msra.mxu0 %v600
        %1193 = vmatprep.subr.mxu0 %v609
        %1194 = vmatpush1.xpose.msra.mxu0 %v608
        %1195 = vmatprep.subr.mxu0 %v617
        %1196 = vmatpush1.xpose.msra.mxu0 %v616
        %1197 = vmatprep.subr.mxu0 %v625
        %1198 = vmatpush1.xpose.msra.mxu0 %v624
        %1199 = vmatprep.subr.mxu0 %v633
        %1200 = vmatpush1.xpose.msra.mxu0 %v632
        %1201 = vmatprep.subr.mxu0 %v641
        %1202 = vmatpush1.xpose.msra.mxu0 %v640
        %1203 = vmatprep.subr.mxu0 %v649
        %1204 = vmatpush1.xpose.msra.mxu0 %v648
        %1205 = vmatprep.subr.mxu0 %v657
        %1206 = vmatpush1.xpose.msra.mxu0 %v656
        %1207 = vmatprep.subr.mxu0 %v665
        %1208 = vmatpush1.xpose.msra.mxu0 %v664
        %1209 = vmatprep.subr.mxu0 %v673
        %1210 = vmatpush1.xpose.msra.mxu0 %v672
        %1211 = vmatprep.subr.mxu0 %v681
        %1212 = vmatpush1.xpose.msra.mxu0 %v680
        %1213 = vmatprep.subr.mxu0 %v689
        %1214 = vmatpush1.xpose.msra.mxu0 %v688
        %1215 = vmatprep.subr.mxu0 %v697
        %1216 = vmatpush1.xpose.msra.mxu0 %v696
        %1217 = vmatprep.subr.mxu0 %v705
        %1218 = vmatpush1.xpose.msra.mxu0 %v704
        %1219 = vmatprep.subr.mxu0 %v713
        %1220 = vmatpush1.xpose.msra.mxu0 %v712
        %1221 = vmatprep.subr.mxu0 %v721
        %1222 = vmatpush1.xpose.msra.mxu0 %v720
        %1223 = vmatprep.subr.mxu0 %v729
        %1224 = vmatpush1.xpose.msra.mxu0 %v728
        %1225 = vmatprep.subr.mxu0 %v737
        %1226 = vmatpush1.xpose.msra.mxu0 %v736
        %1227 = vmatprep.subr.mxu0 %v745
        %1228 = vmatpush1.xpose.msra.mxu0 %v744
        %1229 = vmatprep.subr.mxu0 %v753
        %1230 = vmatpush1.xpose.msra.mxu0 %v752
        %1231 = vmatprep.subr.mxu0 %v761
        %1232 = vmatpush1.xpose.msra.mxu0 %v760
        %1233 = vmatprep.subr.mxu0 %v769
        %1234 = vmatpush1.xpose.msra.mxu0 %v768
        %1235 = vmatprep.subr.mxu0 %v777
        %1236 = vmatpush1.xpose.msra.mxu0 %v776
        %1237 = vmatprep.subr.mxu0 %v785
        %1238 = vmatpush1.xpose.msra.mxu0 %v784
        %1239 = vmatprep.subr.mxu0 %v793
        %1240 = vmatpush1.xpose.msra.mxu0 %v792
        %1241 = vmatprep.subr.mxu0 %v801
        %1242 = vmatpush1.xpose.msra.mxu0 %v800
        %1243 = vmatprep.subr.mxu0 %v809
        %1244 = vmatpush1.xpose.msra.mxu0 %v808
        %1245 = vmatprep.subr.mxu0 %v817
        %1246 = vmatpush1.xpose.msra.mxu0 %v816
        %1247 = vmatprep.subr.mxu0 %v825
        %1248 = vmatpush1.xpose.msra.mxu0 %v824
        %1249 = vmatprep.mubr.f32.mxu0 %v313
        %1250 = vmatmul.mubr.f32.gmra.mrb[0].mxu0 %v312
        %v1251 = vpop.f32.mrb[0].mxu0
        %v1252 = vadd.f32 %v1181, %v1251
        %v1253 = vpop.f32.mrb[0].mxu0
        %v1254 = vadd.f32 %v1183, %v1253
        %1255 = vdwg.mxu0
        %1256 = vmatprep.subr.mxu0 %v579
        %1257 = vmatpush1.xpose.msra.mxu0 %v578
        %1258 = vmatprep.subr.mxu0 %v587
        %1259 = vmatpush1.xpose.msra.mxu0 %v586
        %1260 = vmatprep.subr.mxu0 %v595
        %1261 = vmatpush1.xpose.msra.mxu0 %v594
        %1262 = vmatprep.subr.mxu0 %v603
        %1263 = vmatpush1.xpose.msra.mxu0 %v602
        %1264 = vmatprep.subr.mxu0 %v611
        %1265 = vmatpush1.xpose.msra.mxu0 %v610
        %1266 = vmatprep.subr.mxu0 %v619
        %1267 = vmatpush1.xpose.msra.mxu0 %v618
        %1268 = vmatprep.subr.mxu0 %v627
        %1269 = vmatpush1.xpose.msra.mxu0 %v626
        %1270 = vmatprep.subr.mxu0 %v635
        %1271 = vmatpush1.xpose.msra.mxu0 %v634
        %1272 = vmatprep.subr.mxu0 %v643
        %1273 = vmatpush1.xpose.msra.mxu0 %v642
        %1274 = vmatprep.subr.mxu0 %v651
        %1275 = vmatpush1.xpose.msra.mxu0 %v650
        %1276 = vmatprep.subr.mxu0 %v659
        %1277 = vmatpush1.xpose.msra.mxu0 %v658
        %1278 = vmatprep.subr.mxu0 %v667
        %1279 = vmatpush1.xpose.msra.mxu0 %v666
        %1280 = vmatprep.subr.mxu0 %v675
        %1281 = vmatpush1.xpose.msra.mxu0 %v674
        %1282 = vmatprep.subr.mxu0 %v683
        %1283 = vmatpush1.xpose.msra.mxu0 %v682
        %1284 = vmatprep.subr.mxu0 %v691
        %1285 = vmatpush1.xpose.msra.mxu0 %v690
        %1286 = vmatprep.subr.mxu0 %v699
        %1287 = vmatpush1.xpose.msra.mxu0 %v698
        %1288 = vmatprep.subr.mxu0 %v707
        %1289 = vmatpush1.xpose.msra.mxu0 %v706
        %1290 = vmatprep.subr.mxu0 %v715
        %1291 = vmatpush1.xpose.msra.mxu0 %v714
        %1292 = vmatprep.subr.mxu0 %v723
        %1293 = vmatpush1.xpose.msra.mxu0 %v722
        %1294 = vmatprep.subr.mxu0 %v731
        %1295 = vmatpush1.xpose.msra.mxu0 %v730
        %1296 = vmatprep.subr.mxu0 %v739
        %1297 = vmatpush1.xpose.msra.mxu0 %v738
        %1298 = vmatprep.subr.mxu0 %v747
        %1299 = vmatpush1.xpose.msra.mxu0 %v746
        %1300 = vmatprep.subr.mxu0 %v755
        %1301 = vmatpush1.xpose.msra.mxu0 %v754
        %1302 = vmatprep.subr.mxu0 %v763
        %1303 = vmatpush1.xpose.msra.mxu0 %v762
        %1304 = vmatprep.subr.mxu0 %v771
        %1305 = vmatpush1.xpose.msra.mxu0 %v770
        %1306 = vmatprep.subr.mxu0 %v779
        %1307 = vmatpush1.xpose.msra.mxu0 %v778
        %1308 = vmatprep.subr.mxu0 %v787
        %1309 = vmatpush1.xpose.msra.mxu0 %v786
        %1310 = vmatprep.subr.mxu0 %v795
        %1311 = vmatpush1.xpose.msra.mxu0 %v794
        %1312 = vmatprep.subr.mxu0 %v803
        %1313 = vmatpush1.xpose.msra.mxu0 %v802
        %1314 = vmatprep.subr.mxu0 %v811
        %1315 = vmatpush1.xpose.msra.mxu0 %v810
        %1316 = vmatprep.subr.mxu0 %v819
        %1317 = vmatpush1.xpose.msra.mxu0 %v818
        %1318 = vmatprep.subr.mxu0 %v827
        %1319 = vmatpush1.xpose.msra.mxu0 %v826
        %1320 = vmatprep.mubr.f32.mxu0 %v315
        %1321 = vmatmul.mubr.f32.gmra.mrb[0].mxu0 %v314
        %v1322 = vpop.f32.mrb[0].mxu0
        %v1323 = vadd.f32 %v1252, %v1322
        %v1324 = vpop.f32.mrb[0].mxu0
        %v1325 = vadd.f32 %v1254, %v1324
        %1326 = vdwg.mxu0
        %1327 = vmatprep.subr.mxu0 %v581
        %1328 = vmatpush1.xpose.msra.mxu0 %v580
        %1329 = vmatprep.subr.mxu0 %v589
        %1330 = vmatpush1.xpose.msra.mxu0 %v588
        %1331 = vmatprep.subr.mxu0 %v597
        %1332 = vmatpush1.xpose.msra.mxu0 %v596
        %1333 = vmatprep.subr.mxu0 %v605
        %1334 = vmatpush1.xpose.msra.mxu0 %v604
        %1335 = vmatprep.subr.mxu0 %v613
        %1336 = vmatpush1.xpose.msra.mxu0 %v612
        %1337 = vmatprep.subr.mxu0 %v621
        %1338 = vmatpush1.xpose.msra.mxu0 %v620
        %1339 = vmatprep.subr.mxu0 %v629
        %1340 = vmatpush1.xpose.msra.mxu0 %v628
        %1341 = vmatprep.subr.mxu0 %v637
        %1342 = vmatpush1.xpose.msra.mxu0 %v636
        %1343 = vmatprep.subr.mxu0 %v645
        %1344 = vmatpush1.xpose.msra.mxu0 %v644
        %1345 = vmatprep.subr.mxu0 %v653
        %1346 = vmatpush1.xpose.msra.mxu0 %v652
        %1347 = vmatprep.subr.mxu0 %v661
        %1348 = vmatpush1.xpose.msra.mxu0 %v660
        %1349 = vmatprep.subr.mxu0 %v669
        %1350 = vmatpush1.xpose.msra.mxu0 %v668
        %1351 = vmatprep.subr.mxu0 %v677
        %1352 = vmatpush1.xpose.msra.mxu0 %v676
        %1353 = vmatprep.subr.mxu0 %v685
        %1354 = vmatpush1.xpose.msra.mxu0 %v684
        %1355 = vmatprep.subr.mxu0 %v693
        %1356 = vmatpush1.xpose.msra.mxu0 %v692
        %1357 = vmatprep.subr.mxu0 %v701
        %1358 = vmatpush1.xpose.msra.mxu0 %v700
        %1359 = vmatprep.subr.mxu0 %v709
        %1360 = vmatpush1.xpose.msra.mxu0 %v708
        %1361 = vmatprep.subr.mxu0 %v717
        %1362 = vmatpush1.xpose.msra.mxu0 %v716
        %1363 = vmatprep.subr.mxu0 %v725
        %1364 = vmatpush1.xpose.msra.mxu0 %v724
        %1365 = vmatprep.subr.mxu0 %v733
        %1366 = vmatpush1.xpose.msra.mxu0 %v732
        %1367 = vmatprep.subr.mxu0 %v741
        %1368 = vmatpush1.xpose.msra.mxu0 %v740
        %1369 = vmatprep.subr.mxu0 %v749
        %1370 = vmatpush1.xpose.msra.mxu0 %v748
        %1371 = vmatprep.subr.mxu0 %v757
        %1372 = vmatpush1.xpose.msra.mxu0 %v756
        %1373 = vmatprep.subr.mxu0 %v765
        %1374 = vmatpush1.xpose.msra.mxu0 %v764
        %1375 = vmatprep.subr.mxu0 %v773
        %1376 = vmatpush1.xpose.msra.mxu0 %v772
        %1377 = vmatprep.subr.mxu0 %v781
        %1378 = vmatpush1.xpose.msra.mxu0 %v780
        %1379 = vmatprep.subr.mxu0 %v789
        %1380 = vmatpush1.xpose.msra.mxu0 %v788
        %1381 = vmatprep.subr.mxu0 %v797
        %1382 = vmatpush1.xpose.msra.mxu0 %v796
        %1383 = vmatprep.subr.mxu0 %v805
        %1384 = vmatpush1.xpose.msra.mxu0 %v804
        %1385 = vmatprep.subr.mxu0 %v813
        %1386 = vmatpush1.xpose.msra.mxu0 %v812
        %1387 = vmatprep.subr.mxu0 %v821
        %1388 = vmatpush1.xpose.msra.mxu0 %v820
        %1389 = vmatprep.subr.mxu0 %v829
        %1390 = vmatpush1.xpose.msra.mxu0 %v828
        %1391 = vmatprep.mubr.f32.mxu0 %v317
        %1392 = vmatmul.mubr.f32.gmra.mrb[0].mxu0 %v316
        %v1393 = vpop.f32.mrb[0].mxu0
        %v1394 = vadd.f32 %v1323, %v1393
        %v1395 = vpop.f32.mrb[0].mxu0
        %v1396 = vadd.f32 %v1325, %v1395
        %1397 = vdwg.mxu0
        %v1398 = vmul.f32 %v1110, 0.5
        %v1399 = vmul.f32 %v1112, 0.5
        %v1400 = vmul.f32 %v1394, 0.5
        %v1401 = vmul.f32 %v1396, 0.5
        %v1402 = vmul.f32 %v1110, 0.70710677
        %v1403 = vmul.f32 %v1112, 0.70710677
        %v1404 = vmul.f32 %v1394, 0.70710677
        %v1405 = vmul.f32 %v1396, 0.70710677
        %v1406 = verf.f32.pop %v1402
        %v1407 = verf.f32.pop %v1403
        %v1408 = verf.f32.pop %v1404
        %v1409 = verf.f32.pop %v1405
        %v1410 = vadd.f32 %v1406, 1.0
        %v1411 = vadd.f32 %v1407, 1.0
        %v1412 = vadd.f32 %v1408, 1.0
        %v1413 = vadd.f32 %v1409, 1.0
        %v1414 = vmul.f32 %v1398, %v1410
        %v1415 = vmul.f32 %v1399, %v1411
        %v1416 = vmul.f32 %v1400, %v1412
        %v1417 = vmul.f32 %v1401, %v1413
        %v1418 = vld [vmem:[#allocation9] sm:$0xff]
        %v1419 = vld [vmem:[#allocation9 + $0x8] sm:$0xff]
        %v1420 = vld [vmem:[#allocation9 + $0x10] sm:$0xff]
        %v1421 = vld [vmem:[#allocation9 + $0x18] sm:$0xff]
        %v1422 = vld [vmem:[#allocation9 + $0x20] sm:$0xff]
        %v1423 = vld [vmem:[#allocation9 + $0x28] sm:$0xff]
        %v1424 = vld [vmem:[#allocation9 + $0x30] sm:$0xff]
        %v1425 = vld [vmem:[#allocation9 + $0x38] sm:$0xff]
        %v1426 = vld [vmem:[%s226] sm:$0xff]
        %v1427 = vld [vmem:[%s226 + $0x8] sm:$0xff]
        %v1428 = vld [vmem:[%s226 + $0x10] sm:$0xff]
        %v1429 = vld [vmem:[%s226 + $0x18] sm:$0xff]
        %v1430 = vld [vmem:[%s226 + $0x20] sm:$0xff]
        %v1431 = vld [vmem:[%s226 + $0x28] sm:$0xff]
        %v1432 = vld [vmem:[%s226 + $0x30] sm:$0xff]
        %v1433 = vld [vmem:[%s226 + $0x38] sm:$0xff]
        %v1434 = vld [vmem:[%s226 + $0x40] sm:$0xff]
        %v1435 = vld [vmem:[%s226 + $0x48] sm:$0xff]
        %v1436 = vld [vmem:[%s226 + $0x50] sm:$0xff]
        %v1437 = vld [vmem:[%s226 + $0x58] sm:$0xff]
        %v1438 = vld [vmem:[%s226 + $0x60] sm:$0xff]
        %v1439 = vld [vmem:[%s226 + $0x68] sm:$0xff]
        %v1440 = vld [vmem:[%s226 + $0x70] sm:$0xff]
        %v1441 = vld [vmem:[%s226 + $0x78] sm:$0xff]
        %v1442 = vld [vmem:[%s226 + $0x80] sm:$0xff]
        %v1443 = vld [vmem:[%s226 + $0x88] sm:$0xff]
        %v1444 = vld [vmem:[%s226 + $0x90] sm:$0xff]
        %v1445 = vld [vmem:[%s226 + $0x98] sm:$0xff]
        %v1446 = vld [vmem:[%s226 + $0xa0] sm:$0xff]
        %v1447 = vld [vmem:[%s226 + $0xa8] sm:$0xff]
        %v1448 = vld [vmem:[%s226 + $0xb0] sm:$0xff]
        %v1449 = vld [vmem:[%s226 + $0xb8] sm:$0xff]
        %v1450 = vld [vmem:[%s226 + $0xc0] sm:$0xff]
        %v1451 = vld [vmem:[%s226 + $0xc8] sm:$0xff]
        %v1452 = vld [vmem:[%s226 + $0xd0] sm:$0xff]
        %v1453 = vld [vmem:[%s226 + $0xd8] sm:$0xff]
        %v1454 = vld [vmem:[%s226 + $0xe0] sm:$0xff]
        %v1455 = vld [vmem:[%s226 + $0xe8] sm:$0xff]
        %v1456 = vld [vmem:[%s226 + $0xf0] sm:$0xff]
        %v1457 = vld [vmem:[%s226 + $0xf8] sm:$0xff]
        %v1458 = vld [vmem:[%s226 + $0x100] sm:$0xff]
        %v1459 = vld [vmem:[%s226 + $0x108] sm:$0xff]
        %v1460 = vld [vmem:[%s226 + $0x110] sm:$0xff]
        %v1461 = vld [vmem:[%s226 + $0x118] sm:$0xff]
        %v1462 = vld [vmem:[%s226 + $0x120] sm:$0xff]
        %v1463 = vld [vmem:[%s226 + $0x128] sm:$0xff]
        %v1464 = vld [vmem:[%s226 + $0x130] sm:$0xff]
        %v1465 = vld [vmem:[%s226 + $0x138] sm:$0xff]
        %v1466 = vld [vmem:[%s226 + $0x140] sm:$0xff]
        %v1467 = vld [vmem:[%s226 + $0x148] sm:$0xff]
        %v1468 = vld [vmem:[%s226 + $0x150] sm:$0xff]
        %v1469 = vld [vmem:[%s226 + $0x158] sm:$0xff]
        %v1470 = vld [vmem:[%s226 + $0x160] sm:$0xff]
        %v1471 = vld [vmem:[%s226 + $0x168] sm:$0xff]
        %v1472 = vld [vmem:[%s226 + $0x170] sm:$0xff]
        %v1473 = vld [vmem:[%s226 + $0x178] sm:$0xff]
        %v1474 = vld [vmem:[%s226 + $0x180] sm:$0xff]
        %v1475 = vld [vmem:[%s226 + $0x188] sm:$0xff]
        %v1476 = vld [vmem:[%s226 + $0x190] sm:$0xff]
        %v1477 = vld [vmem:[%s226 + $0x198] sm:$0xff]
        %v1478 = vld [vmem:[%s226 + $0x1a0] sm:$0xff]
        %v1479 = vld [vmem:[%s226 + $0x1a8] sm:$0xff]
        %v1480 = vld [vmem:[%s226 + $0x1b0] sm:$0xff]
        %v1481 = vld [vmem:[%s226 + $0x1b8] sm:$0xff]
        %v1482 = vld [vmem:[%s226 + $0x1c0] sm:$0xff]
        %v1483 = vld [vmem:[%s226 + $0x1c8] sm:$0xff]
        %v1484 = vld [vmem:[%s226 + $0x1d0] sm:$0xff]
        %v1485 = vld [vmem:[%s226 + $0x1d8] sm:$0xff]
        %v1486 = vld [vmem:[%s226 + $0x1e0] sm:$0xff]
        %v1487 = vld [vmem:[%s226 + $0x1e8] sm:$0xff]
        %v1488 = vld [vmem:[%s226 + $0x1f0] sm:$0xff]
        %v1489 = vld [vmem:[%s226 + $0x1f8] sm:$0xff]
        %v1490 = vld [vmem:[%s226 + $0x200] sm:$0xff]
        %v1491 = vld [vmem:[%s226 + $0x208] sm:$0xff]
        %v1492 = vld [vmem:[%s226 + $0x210] sm:$0xff]
        %v1493 = vld [vmem:[%s226 + $0x218] sm:$0xff]
        %v1494 = vld [vmem:[%s226 + $0x220] sm:$0xff]
        %v1495 = vld [vmem:[%s226 + $0x228] sm:$0xff]
        %v1496 = vld [vmem:[%s226 + $0x230] sm:$0xff]
        %v1497 = vld [vmem:[%s226 + $0x238] sm:$0xff]
        %v1498 = vld [vmem:[%s226 + $0x240] sm:$0xff]
        %v1499 = vld [vmem:[%s226 + $0x248] sm:$0xff]
        %v1500 = vld [vmem:[%s226 + $0x250] sm:$0xff]
        %v1501 = vld [vmem:[%s226 + $0x258] sm:$0xff]
        %v1502 = vld [vmem:[%s226 + $0x260] sm:$0xff]
        %v1503 = vld [vmem:[%s226 + $0x268] sm:$0xff]
        %v1504 = vld [vmem:[%s226 + $0x270] sm:$0xff]
        %v1505 = vld [vmem:[%s226 + $0x278] sm:$0xff]
        %v1506 = vld [vmem:[%s226 + $0x280] sm:$0xff]
        %v1507 = vld [vmem:[%s226 + $0x288] sm:$0xff]
        %v1508 = vld [vmem:[%s226 + $0x290] sm:$0xff]
        %v1509 = vld [vmem:[%s226 + $0x298] sm:$0xff]
        %v1510 = vld [vmem:[%s226 + $0x2a0] sm:$0xff]
        %v1511 = vld [vmem:[%s226 + $0x2a8] sm:$0xff]
        %v1512 = vld [vmem:[%s226 + $0x2b0] sm:$0xff]
        %v1513 = vld [vmem:[%s226 + $0x2b8] sm:$0xff]
        %v1514 = vld [vmem:[%s226 + $0x2c0] sm:$0xff]
        %v1515 = vld [vmem:[%s226 + $0x2c8] sm:$0xff]
        %v1516 = vld [vmem:[%s226 + $0x2d0] sm:$0xff]
        %v1517 = vld [vmem:[%s226 + $0x2d8] sm:$0xff]
        %v1518 = vld [vmem:[%s226 + $0x2e0] sm:$0xff]
        %v1519 = vld [vmem:[%s226 + $0x2e8] sm:$0xff]
        %v1520 = vld [vmem:[%s226 + $0x2f0] sm:$0xff]
        %v1521 = vld [vmem:[%s226 + $0x2f8] sm:$0xff]
        %v1522 = vld [vmem:[%s226 + $0x300] sm:$0xff]
        %v1523 = vld [vmem:[%s226 + $0x308] sm:$0xff]
        %v1524 = vld [vmem:[%s226 + $0x310] sm:$0xff]
        %v1525 = vld [vmem:[%s226 + $0x318] sm:$0xff]
        %v1526 = vld [vmem:[%s226 + $0x320] sm:$0xff]
        %v1527 = vld [vmem:[%s226 + $0x328] sm:$0xff]
        %v1528 = vld [vmem:[%s226 + $0x330] sm:$0xff]
        %v1529 = vld [vmem:[%s226 + $0x338] sm:$0xff]
        %v1530 = vld [vmem:[%s226 + $0x340] sm:$0xff]
        %v1531 = vld [vmem:[%s226 + $0x348] sm:$0xff]
        %v1532 = vld [vmem:[%s226 + $0x350] sm:$0xff]
        %v1533 = vld [vmem:[%s226 + $0x358] sm:$0xff]
        %v1534 = vld [vmem:[%s226 + $0x360] sm:$0xff]
        %v1535 = vld [vmem:[%s226 + $0x368] sm:$0xff]
        %v1536 = vld [vmem:[%s226 + $0x370] sm:$0xff]
        %v1537 = vld [vmem:[%s226 + $0x378] sm:$0xff]
        %v1538 = vld [vmem:[%s226 + $0x380] sm:$0xff]
        %v1539 = vld [vmem:[%s226 + $0x388] sm:$0xff]
        %v1540 = vld [vmem:[%s226 + $0x390] sm:$0xff]
        %v1541 = vld [vmem:[%s226 + $0x398] sm:$0xff]
        %v1542 = vld [vmem:[%s226 + $0x3a0] sm:$0xff]
        %v1543 = vld [vmem:[%s226 + $0x3a8] sm:$0xff]
        %v1544 = vld [vmem:[%s226 + $0x3b0] sm:$0xff]
        %v1545 = vld [vmem:[%s226 + $0x3b8] sm:$0xff]
        %v1546 = vld [vmem:[%s226 + $0x3c0] sm:$0xff]
        %v1547 = vld [vmem:[%s226 + $0x3c8] sm:$0xff]
        %v1548 = vld [vmem:[%s226 + $0x3d0] sm:$0xff]
        %v1549 = vld [vmem:[%s226 + $0x3d8] sm:$0xff]
        %v1550 = vld [vmem:[%s226 + $0x3e0] sm:$0xff]
        %v1551 = vld [vmem:[%s226 + $0x3e8] sm:$0xff]
        %v1552 = vld [vmem:[%s226 + $0x3f0] sm:$0xff]
        %v1553 = vld [vmem:[%s226 + $0x3f8] sm:$0xff]
        %v1554 = vld [vmem:[%s226 + $0x400] sm:$0xff]
        %v1555 = vld [vmem:[%s226 + $0x408] sm:$0xff]
        %v1556 = vld [vmem:[%s226 + $0x410] sm:$0xff]
        %v1557 = vld [vmem:[%s226 + $0x418] sm:$0xff]
        %v1558 = vld [vmem:[%s226 + $0x420] sm:$0xff]
        %v1559 = vld [vmem:[%s226 + $0x428] sm:$0xff]
        %v1560 = vld [vmem:[%s226 + $0x430] sm:$0xff]
        %v1561 = vld [vmem:[%s226 + $0x438] sm:$0xff]
        %v1562 = vld [vmem:[%s226 + $0x440] sm:$0xff]
        %v1563 = vld [vmem:[%s226 + $0x448] sm:$0xff]
        %v1564 = vld [vmem:[%s226 + $0x450] sm:$0xff]
        %v1565 = vld [vmem:[%s226 + $0x458] sm:$0xff]
        %v1566 = vld [vmem:[%s226 + $0x460] sm:$0xff]
        %v1567 = vld [vmem:[%s226 + $0x468] sm:$0xff]
        %v1568 = vld [vmem:[%s226 + $0x470] sm:$0xff]
        %v1569 = vld [vmem:[%s226 + $0x478] sm:$0xff]
        %v1570 = vld [vmem:[%s226 + $0x480] sm:$0xff]
        %v1571 = vld [vmem:[%s226 + $0x488] sm:$0xff]
        %v1572 = vld [vmem:[%s226 + $0x490] sm:$0xff]
        %v1573 = vld [vmem:[%s226 + $0x498] sm:$0xff]
        %v1574 = vld [vmem:[%s226 + $0x4a0] sm:$0xff]
        %v1575 = vld [vmem:[%s226 + $0x4a8] sm:$0xff]
        %v1576 = vld [vmem:[%s226 + $0x4b0] sm:$0xff]
        %v1577 = vld [vmem:[%s226 + $0x4b8] sm:$0xff]
        %v1578 = vld [vmem:[%s226 + $0x4c0] sm:$0xff]
        %v1579 = vld [vmem:[%s226 + $0x4c8] sm:$0xff]
        %v1580 = vld [vmem:[%s226 + $0x4d0] sm:$0xff]
        %v1581 = vld [vmem:[%s226 + $0x4d8] sm:$0xff]
        %v1582 = vld [vmem:[%s226 + $0x4e0] sm:$0xff]
        %v1583 = vld [vmem:[%s226 + $0x4e8] sm:$0xff]
        %v1584 = vld [vmem:[%s226 + $0x4f0] sm:$0xff]
        %v1585 = vld [vmem:[%s226 + $0x4f8] sm:$0xff]
        %v1586 = vld [vmem:[%s226 + $0x500] sm:$0xff]
        %v1587 = vld [vmem:[%s226 + $0x508] sm:$0xff]
        %v1588 = vld [vmem:[%s226 + $0x510] sm:$0xff]
        %v1589 = vld [vmem:[%s226 + $0x518] sm:$0xff]
        %v1590 = vld [vmem:[%s226 + $0x520] sm:$0xff]
        %v1591 = vld [vmem:[%s226 + $0x528] sm:$0xff]
        %v1592 = vld [vmem:[%s226 + $0x530] sm:$0xff]
        %v1593 = vld [vmem:[%s226 + $0x538] sm:$0xff]
        %v1594 = vld [vmem:[%s226 + $0x540] sm:$0xff]
        %v1595 = vld [vmem:[%s226 + $0x548] sm:$0xff]
        %v1596 = vld [vmem:[%s226 + $0x550] sm:$0xff]
        %v1597 = vld [vmem:[%s226 + $0x558] sm:$0xff]
        %v1598 = vld [vmem:[%s226 + $0x560] sm:$0xff]
        %v1599 = vld [vmem:[%s226 + $0x568] sm:$0xff]
        %v1600 = vld [vmem:[%s226 + $0x570] sm:$0xff]
        %v1601 = vld [vmem:[%s226 + $0x578] sm:$0xff]
        %v1602 = vld [vmem:[%s226 + $0x580] sm:$0xff]
        %v1603 = vld [vmem:[%s226 + $0x588] sm:$0xff]
        %v1604 = vld [vmem:[%s226 + $0x590] sm:$0xff]
        %v1605 = vld [vmem:[%s226 + $0x598] sm:$0xff]
        %v1606 = vld [vmem:[%s226 + $0x5a0] sm:$0xff]
        %v1607 = vld [vmem:[%s226 + $0x5a8] sm:$0xff]
        %v1608 = vld [vmem:[%s226 + $0x5b0] sm:$0xff]
        %v1609 = vld [vmem:[%s226 + $0x5b8] sm:$0xff]
        %v1610 = vld [vmem:[%s226 + $0x5c0] sm:$0xff]
        %v1611 = vld [vmem:[%s226 + $0x5c8] sm:$0xff]
        %v1612 = vld [vmem:[%s226 + $0x5d0] sm:$0xff]
        %v1613 = vld [vmem:[%s226 + $0x5d8] sm:$0xff]
        %v1614 = vld [vmem:[%s226 + $0x5e0] sm:$0xff]
        %v1615 = vld [vmem:[%s226 + $0x5e8] sm:$0xff]
        %v1616 = vld [vmem:[%s226 + $0x5f0] sm:$0xff]
        %v1617 = vld [vmem:[%s226 + $0x5f8] sm:$0xff]
        %v1618 = vld [vmem:[%s226 + $0x600] sm:$0xff]
        %v1619 = vld [vmem:[%s226 + $0x608] sm:$0xff]
        %v1620 = vld [vmem:[%s226 + $0x610] sm:$0xff]
        %v1621 = vld [vmem:[%s226 + $0x618] sm:$0xff]
        %v1622 = vld [vmem:[%s226 + $0x620] sm:$0xff]
        %v1623 = vld [vmem:[%s226 + $0x628] sm:$0xff]
        %v1624 = vld [vmem:[%s226 + $0x630] sm:$0xff]
        %v1625 = vld [vmem:[%s226 + $0x638] sm:$0xff]
        %v1626 = vld [vmem:[%s226 + $0x640] sm:$0xff]
        %v1627 = vld [vmem:[%s226 + $0x648] sm:$0xff]
        %v1628 = vld [vmem:[%s226 + $0x650] sm:$0xff]
        %v1629 = vld [vmem:[%s226 + $0x658] sm:$0xff]
        %v1630 = vld [vmem:[%s226 + $0x660] sm:$0xff]
        %v1631 = vld [vmem:[%s226 + $0x668] sm:$0xff]
        %v1632 = vld [vmem:[%s226 + $0x670] sm:$0xff]
        %v1633 = vld [vmem:[%s226 + $0x678] sm:$0xff]
        %v1634 = vld [vmem:[%s226 + $0x680] sm:$0xff]
        %v1635 = vld [vmem:[%s226 + $0x688] sm:$0xff]
        %v1636 = vld [vmem:[%s226 + $0x690] sm:$0xff]
        %v1637 = vld [vmem:[%s226 + $0x698] sm:$0xff]
        %v1638 = vld [vmem:[%s226 + $0x6a0] sm:$0xff]
        %v1639 = vld [vmem:[%s226 + $0x6a8] sm:$0xff]
        %v1640 = vld [vmem:[%s226 + $0x6b0] sm:$0xff]
        %v1641 = vld [vmem:[%s226 + $0x6b8] sm:$0xff]
        %v1642 = vld [vmem:[%s226 + $0x6c0] sm:$0xff]
        %v1643 = vld [vmem:[%s226 + $0x6c8] sm:$0xff]
        %v1644 = vld [vmem:[%s226 + $0x6d0] sm:$0xff]
        %v1645 = vld [vmem:[%s226 + $0x6d8] sm:$0xff]
        %v1646 = vld [vmem:[%s226 + $0x6e0] sm:$0xff]
        %v1647 = vld [vmem:[%s226 + $0x6e8] sm:$0xff]
        %v1648 = vld [vmem:[%s226 + $0x6f0] sm:$0xff]
        %v1649 = vld [vmem:[%s226 + $0x6f8] sm:$0xff]
        %v1650 = vld [vmem:[%s226 + $0x700] sm:$0xff]
        %v1651 = vld [vmem:[%s226 + $0x708] sm:$0xff]
        %v1652 = vld [vmem:[%s226 + $0x710] sm:$0xff]
        %v1653 = vld [vmem:[%s226 + $0x718] sm:$0xff]
        %v1654 = vld [vmem:[%s226 + $0x720] sm:$0xff]
        %v1655 = vld [vmem:[%s226 + $0x728] sm:$0xff]
        %v1656 = vld [vmem:[%s226 + $0x730] sm:$0xff]
        %v1657 = vld [vmem:[%s226 + $0x738] sm:$0xff]
        %v1658 = vld [vmem:[%s226 + $0x740] sm:$0xff]
        %v1659 = vld [vmem:[%s226 + $0x748] sm:$0xff]
        %v1660 = vld [vmem:[%s226 + $0x750] sm:$0xff]
        %v1661 = vld [vmem:[%s226 + $0x758] sm:$0xff]
        %v1662 = vld [vmem:[%s226 + $0x760] sm:$0xff]
        %v1663 = vld [vmem:[%s226 + $0x768] sm:$0xff]
        %v1664 = vld [vmem:[%s226 + $0x770] sm:$0xff]
        %v1665 = vld [vmem:[%s226 + $0x778] sm:$0xff]
        %v1666 = vld [vmem:[%s226 + $0x780] sm:$0xff]
        %v1667 = vld [vmem:[%s226 + $0x788] sm:$0xff]
        %v1668 = vld [vmem:[%s226 + $0x790] sm:$0xff]
        %v1669 = vld [vmem:[%s226 + $0x798] sm:$0xff]
        %v1670 = vld [vmem:[%s226 + $0x7a0] sm:$0xff]
        %v1671 = vld [vmem:[%s226 + $0x7a8] sm:$0xff]
        %v1672 = vld [vmem:[%s226 + $0x7b0] sm:$0xff]
        %v1673 = vld [vmem:[%s226 + $0x7b8] sm:$0xff]
        %v1674 = vld [vmem:[%s226 + $0x7c0] sm:$0xff]
        %v1675 = vld [vmem:[%s226 + $0x7c8] sm:$0xff]
        %v1676 = vld [vmem:[%s226 + $0x7d0] sm:$0xff]
        %v1677 = vld [vmem:[%s226 + $0x7d8] sm:$0xff]
        %v1678 = vld [vmem:[%s226 + $0x7e0] sm:$0xff]
        %v1679 = vld [vmem:[%s226 + $0x7e8] sm:$0xff]
        %v1680 = vld [vmem:[%s226 + $0x7f0] sm:$0xff]
        %v1681 = vld [vmem:[%s226 + $0x7f8] sm:$0xff]
        %v1682 = vld [vmem:[%s226 + $0x800] sm:$0xff]
        %v1683 = vld [vmem:[%s226 + $0x808] sm:$0xff]
        %v1684 = vld [vmem:[%s226 + $0x810] sm:$0xff]
        %v1685 = vld [vmem:[%s226 + $0x818] sm:$0xff]
        %v1686 = vld [vmem:[%s226 + $0x820] sm:$0xff]
        %v1687 = vld [vmem:[%s226 + $0x828] sm:$0xff]
        %v1688 = vld [vmem:[%s226 + $0x830] sm:$0xff]
        %v1689 = vld [vmem:[%s226 + $0x838] sm:$0xff]
        %v1690 = vld [vmem:[%s226 + $0x840] sm:$0xff]
        %v1691 = vld [vmem:[%s226 + $0x848] sm:$0xff]
        %v1692 = vld [vmem:[%s226 + $0x850] sm:$0xff]
        %v1693 = vld [vmem:[%s226 + $0x858] sm:$0xff]
        %v1694 = vld [vmem:[%s226 + $0x860] sm:$0xff]
        %v1695 = vld [vmem:[%s226 + $0x868] sm:$0xff]
        %v1696 = vld [vmem:[%s226 + $0x870] sm:$0xff]
        %v1697 = vld [vmem:[%s226 + $0x878] sm:$0xff]
        %v1698 = vld [vmem:[%s226 + $0x880] sm:$0xff]
        %v1699 = vld [vmem:[%s226 + $0x888] sm:$0xff]
        %v1700 = vld [vmem:[%s226 + $0x890] sm:$0xff]
        %v1701 = vld [vmem:[%s226 + $0x898] sm:$0xff]
        %v1702 = vld [vmem:[%s226 + $0x8a0] sm:$0xff]
        %v1703 = vld [vmem:[%s226 + $0x8a8] sm:$0xff]
        %v1704 = vld [vmem:[%s226 + $0x8b0] sm:$0xff]
        %v1705 = vld [vmem:[%s226 + $0x8b8] sm:$0xff]
        %v1706 = vld [vmem:[%s226 + $0x8c0] sm:$0xff]
        %v1707 = vld [vmem:[%s226 + $0x8c8] sm:$0xff]
        %v1708 = vld [vmem:[%s226 + $0x8d0] sm:$0xff]
        %v1709 = vld [vmem:[%s226 + $0x8d8] sm:$0xff]
        %v1710 = vld [vmem:[%s226 + $0x8e0] sm:$0xff]
        %v1711 = vld [vmem:[%s226 + $0x8e8] sm:$0xff]
        %v1712 = vld [vmem:[%s226 + $0x8f0] sm:$0xff]
        %v1713 = vld [vmem:[%s226 + $0x8f8] sm:$0xff]
        %v1714 = vld [vmem:[%s226 + $0x900] sm:$0xff]
        %v1715 = vld [vmem:[%s226 + $0x908] sm:$0xff]
        %v1716 = vld [vmem:[%s226 + $0x910] sm:$0xff]
        %v1717 = vld [vmem:[%s226 + $0x918] sm:$0xff]
        %v1718 = vld [vmem:[%s226 + $0x920] sm:$0xff]
        %v1719 = vld [vmem:[%s226 + $0x928] sm:$0xff]
        %v1720 = vld [vmem:[%s226 + $0x930] sm:$0xff]
        %v1721 = vld [vmem:[%s226 + $0x938] sm:$0xff]
        %v1722 = vld [vmem:[%s226 + $0x940] sm:$0xff]
        %v1723 = vld [vmem:[%s226 + $0x948] sm:$0xff]
        %v1724 = vld [vmem:[%s226 + $0x950] sm:$0xff]
        %v1725 = vld [vmem:[%s226 + $0x958] sm:$0xff]
        %v1726 = vld [vmem:[%s226 + $0x960] sm:$0xff]
        %v1727 = vld [vmem:[%s226 + $0x968] sm:$0xff]
        %v1728 = vld [vmem:[%s226 + $0x970] sm:$0xff]
        %v1729 = vld [vmem:[%s226 + $0x978] sm:$0xff]
        %v1730 = vld [vmem:[%s226 + $0x980] sm:$0xff]
        %v1731 = vld [vmem:[%s226 + $0x988] sm:$0xff]
        %v1732 = vld [vmem:[%s226 + $0x990] sm:$0xff]
        %v1733 = vld [vmem:[%s226 + $0x998] sm:$0xff]
        %v1734 = vld [vmem:[%s226 + $0x9a0] sm:$0xff]
        %v1735 = vld [vmem:[%s226 + $0x9a8] sm:$0xff]
        %v1736 = vld [vmem:[%s226 + $0x9b0] sm:$0xff]
        %v1737 = vld [vmem:[%s226 + $0x9b8] sm:$0xff]
        %v1738 = vld [vmem:[%s226 + $0x9c0] sm:$0xff]
        %v1739 = vld [vmem:[%s226 + $0x9c8] sm:$0xff]
        %v1740 = vld [vmem:[%s226 + $0x9d0] sm:$0xff]
        %v1741 = vld [vmem:[%s226 + $0x9d8] sm:$0xff]
        %v1742 = vld [vmem:[%s226 + $0x9e0] sm:$0xff]
        %v1743 = vld [vmem:[%s226 + $0x9e8] sm:$0xff]
        %v1744 = vld [vmem:[%s226 + $0x9f0] sm:$0xff]
        %v1745 = vld [vmem:[%s226 + $0x9f8] sm:$0xff]
        %v1746 = vld [vmem:[%s226 + $0xa00] sm:$0xff]
        %v1747 = vld [vmem:[%s226 + $0xa08] sm:$0xff]
        %v1748 = vld [vmem:[%s226 + $0xa10] sm:$0xff]
        %v1749 = vld [vmem:[%s226 + $0xa18] sm:$0xff]
        %v1750 = vld [vmem:[%s226 + $0xa20] sm:$0xff]
        %v1751 = vld [vmem:[%s226 + $0xa28] sm:$0xff]
        %v1752 = vld [vmem:[%s226 + $0xa30] sm:$0xff]
        %v1753 = vld [vmem:[%s226 + $0xa38] sm:$0xff]
        %v1754 = vld [vmem:[%s226 + $0xa40] sm:$0xff]
        %v1755 = vld [vmem:[%s226 + $0xa48] sm:$0xff]
        %v1756 = vld [vmem:[%s226 + $0xa50] sm:$0xff]
        %v1757 = vld [vmem:[%s226 + $0xa58] sm:$0xff]
        %v1758 = vld [vmem:[%s226 + $0xa60] sm:$0xff]
        %v1759 = vld [vmem:[%s226 + $0xa68] sm:$0xff]
        %v1760 = vld [vmem:[%s226 + $0xa70] sm:$0xff]
        %v1761 = vld [vmem:[%s226 + $0xa78] sm:$0xff]
        %v1762 = vld [vmem:[%s226 + $0xa80] sm:$0xff]
        %v1763 = vld [vmem:[%s226 + $0xa88] sm:$0xff]
        %v1764 = vld [vmem:[%s226 + $0xa90] sm:$0xff]
        %v1765 = vld [vmem:[%s226 + $0xa98] sm:$0xff]
        %v1766 = vld [vmem:[%s226 + $0xaa0] sm:$0xff]
        %v1767 = vld [vmem:[%s226 + $0xaa8] sm:$0xff]
        %v1768 = vld [vmem:[%s226 + $0xab0] sm:$0xff]
        %v1769 = vld [vmem:[%s226 + $0xab8] sm:$0xff]
        %v1770 = vld [vmem:[%s226 + $0xac0] sm:$0xff]
        %v1771 = vld [vmem:[%s226 + $0xac8] sm:$0xff]
        %v1772 = vld [vmem:[%s226 + $0xad0] sm:$0xff]
        %v1773 = vld [vmem:[%s226 + $0xad8] sm:$0xff]
        %v1774 = vld [vmem:[%s226 + $0xae0] sm:$0xff]
        %v1775 = vld [vmem:[%s226 + $0xae8] sm:$0xff]
        %v1776 = vld [vmem:[%s226 + $0xaf0] sm:$0xff]
        %v1777 = vld [vmem:[%s226 + $0xaf8] sm:$0xff]
        %v1778 = vld [vmem:[%s226 + $0xb00] sm:$0xff]
        %v1779 = vld [vmem:[%s226 + $0xb08] sm:$0xff]
        %v1780 = vld [vmem:[%s226 + $0xb10] sm:$0xff]
        %v1781 = vld [vmem:[%s226 + $0xb18] sm:$0xff]
        %v1782 = vld [vmem:[%s226 + $0xb20] sm:$0xff]
        %v1783 = vld [vmem:[%s226 + $0xb28] sm:$0xff]
        %v1784 = vld [vmem:[%s226 + $0xb30] sm:$0xff]
        %v1785 = vld [vmem:[%s226 + $0xb38] sm:$0xff]
        %v1786 = vld [vmem:[%s226 + $0xb40] sm:$0xff]
        %v1787 = vld [vmem:[%s226 + $0xb48] sm:$0xff]
        %v1788 = vld [vmem:[%s226 + $0xb50] sm:$0xff]
        %v1789 = vld [vmem:[%s226 + $0xb58] sm:$0xff]
        %v1790 = vld [vmem:[%s226 + $0xb60] sm:$0xff]
        %v1791 = vld [vmem:[%s226 + $0xb68] sm:$0xff]
        %v1792 = vld [vmem:[%s226 + $0xb70] sm:$0xff]
        %v1793 = vld [vmem:[%s226 + $0xb78] sm:$0xff]
        %v1794 = vld [vmem:[%s226 + $0xb80] sm:$0xff]
        %v1795 = vld [vmem:[%s226 + $0xb88] sm:$0xff]
        %v1796 = vld [vmem:[%s226 + $0xb90] sm:$0xff]
        %v1797 = vld [vmem:[%s226 + $0xb98] sm:$0xff]
        %v1798 = vld [vmem:[%s226 + $0xba0] sm:$0xff]
        %v1799 = vld [vmem:[%s226 + $0xba8] sm:$0xff]
        %v1800 = vld [vmem:[%s226 + $0xbb0] sm:$0xff]
        %v1801 = vld [vmem:[%s226 + $0xbb8] sm:$0xff]
        %v1802 = vld [vmem:[%s226 + $0xbc0] sm:$0xff]
        %v1803 = vld [vmem:[%s226 + $0xbc8] sm:$0xff]
        %v1804 = vld [vmem:[%s226 + $0xbd0] sm:$0xff]
        %v1805 = vld [vmem:[%s226 + $0xbd8] sm:$0xff]
        %v1806 = vld [vmem:[%s226 + $0xbe0] sm:$0xff]
        %v1807 = vld [vmem:[%s226 + $0xbe8] sm:$0xff]
        %v1808 = vld [vmem:[%s226 + $0xbf0] sm:$0xff]
        %v1809 = vld [vmem:[%s226 + $0xbf8] sm:$0xff]
        %v1810 = vld [vmem:[%s226 + $0xc00] sm:$0xff]
        %v1811 = vld [vmem:[%s226 + $0xc08] sm:$0xff]
        %v1812 = vld [vmem:[%s226 + $0xc10] sm:$0xff]
        %v1813 = vld [vmem:[%s226 + $0xc18] sm:$0xff]
        %v1814 = vld [vmem:[%s226 + $0xc20] sm:$0xff]
        %v1815 = vld [vmem:[%s226 + $0xc28] sm:$0xff]
        %v1816 = vld [vmem:[%s226 + $0xc30] sm:$0xff]
        %v1817 = vld [vmem:[%s226 + $0xc38] sm:$0xff]
        %v1818 = vld [vmem:[%s226 + $0xc40] sm:$0xff]
        %v1819 = vld [vmem:[%s226 + $0xc48] sm:$0xff]
        %v1820 = vld [vmem:[%s226 + $0xc50] sm:$0xff]
        %v1821 = vld [vmem:[%s226 + $0xc58] sm:$0xff]
        %v1822 = vld [vmem:[%s226 + $0xc60] sm:$0xff]
        %v1823 = vld [vmem:[%s226 + $0xc68] sm:$0xff]
        %v1824 = vld [vmem:[%s226 + $0xc70] sm:$0xff]
        %v1825 = vld [vmem:[%s226 + $0xc78] sm:$0xff]
        %v1826 = vld [vmem:[%s226 + $0xc80] sm:$0xff]
        %v1827 = vld [vmem:[%s226 + $0xc88] sm:$0xff]
        %v1828 = vld [vmem:[%s226 + $0xc90] sm:$0xff]
        %v1829 = vld [vmem:[%s226 + $0xc98] sm:$0xff]
        %v1830 = vld [vmem:[%s226 + $0xca0] sm:$0xff]
        %v1831 = vld [vmem:[%s226 + $0xca8] sm:$0xff]
        %v1832 = vld [vmem:[%s226 + $0xcb0] sm:$0xff]
        %v1833 = vld [vmem:[%s226 + $0xcb8] sm:$0xff]
        %v1834 = vld [vmem:[%s226 + $0xcc0] sm:$0xff]
        %v1835 = vld [vmem:[%s226 + $0xcc8] sm:$0xff]
        %v1836 = vld [vmem:[%s226 + $0xcd0] sm:$0xff]
        %v1837 = vld [vmem:[%s226 + $0xcd8] sm:$0xff]
        %v1838 = vld [vmem:[%s226 + $0xce0] sm:$0xff]
        %v1839 = vld [vmem:[%s226 + $0xce8] sm:$0xff]
        %v1840 = vld [vmem:[%s226 + $0xcf0] sm:$0xff]
        %v1841 = vld [vmem:[%s226 + $0xcf8] sm:$0xff]
        %v1842 = vld [vmem:[%s226 + $0xd00] sm:$0xff]
        %v1843 = vld [vmem:[%s226 + $0xd08] sm:$0xff]
        %v1844 = vld [vmem:[%s226 + $0xd10] sm:$0xff]
        %v1845 = vld [vmem:[%s226 + $0xd18] sm:$0xff]
        %v1846 = vld [vmem:[%s226 + $0xd20] sm:$0xff]
        %v1847 = vld [vmem:[%s226 + $0xd28] sm:$0xff]
        %v1848 = vld [vmem:[%s226 + $0xd30] sm:$0xff]
        %v1849 = vld [vmem:[%s226 + $0xd38] sm:$0xff]
        %v1850 = vld [vmem:[%s226 + $0xd40] sm:$0xff]
        %v1851 = vld [vmem:[%s226 + $0xd48] sm:$0xff]
        %v1852 = vld [vmem:[%s226 + $0xd50] sm:$0xff]
        %v1853 = vld [vmem:[%s226 + $0xd58] sm:$0xff]
        %v1854 = vld [vmem:[%s226 + $0xd60] sm:$0xff]
        %v1855 = vld [vmem:[%s226 + $0xd68] sm:$0xff]
        %v1856 = vld [vmem:[%s226 + $0xd70] sm:$0xff]
        %v1857 = vld [vmem:[%s226 + $0xd78] sm:$0xff]
        %v1858 = vld [vmem:[%s226 + $0xd80] sm:$0xff]
        %v1859 = vld [vmem:[%s226 + $0xd88] sm:$0xff]
        %v1860 = vld [vmem:[%s226 + $0xd90] sm:$0xff]
        %v1861 = vld [vmem:[%s226 + $0xd98] sm:$0xff]
        %v1862 = vld [vmem:[%s226 + $0xda0] sm:$0xff]
        %v1863 = vld [vmem:[%s226 + $0xda8] sm:$0xff]
        %v1864 = vld [vmem:[%s226 + $0xdb0] sm:$0xff]
        %v1865 = vld [vmem:[%s226 + $0xdb8] sm:$0xff]
        %v1866 = vld [vmem:[%s226 + $0xdc0] sm:$0xff]
        %v1867 = vld [vmem:[%s226 + $0xdc8] sm:$0xff]
        %v1868 = vld [vmem:[%s226 + $0xdd0] sm:$0xff]
        %v1869 = vld [vmem:[%s226 + $0xdd8] sm:$0xff]
        %v1870 = vld [vmem:[%s226 + $0xde0] sm:$0xff]
        %v1871 = vld [vmem:[%s226 + $0xde8] sm:$0xff]
        %v1872 = vld [vmem:[%s226 + $0xdf0] sm:$0xff]
        %v1873 = vld [vmem:[%s226 + $0xdf8] sm:$0xff]
        %v1874 = vld [vmem:[%s226 + $0xe00] sm:$0xff]
        %v1875 = vld [vmem:[%s226 + $0xe08] sm:$0xff]
        %v1876 = vld [vmem:[%s226 + $0xe10] sm:$0xff]
        %v1877 = vld [vmem:[%s226 + $0xe18] sm:$0xff]
        %v1878 = vld [vmem:[%s226 + $0xe20] sm:$0xff]
        %v1879 = vld [vmem:[%s226 + $0xe28] sm:$0xff]
        %v1880 = vld [vmem:[%s226 + $0xe30] sm:$0xff]
        %v1881 = vld [vmem:[%s226 + $0xe38] sm:$0xff]
        %v1882 = vld [vmem:[%s226 + $0xe40] sm:$0xff]
        %v1883 = vld [vmem:[%s226 + $0xe48] sm:$0xff]
        %v1884 = vld [vmem:[%s226 + $0xe50] sm:$0xff]
        %v1885 = vld [vmem:[%s226 + $0xe58] sm:$0xff]
        %v1886 = vld [vmem:[%s226 + $0xe60] sm:$0xff]
        %v1887 = vld [vmem:[%s226 + $0xe68] sm:$0xff]
        %v1888 = vld [vmem:[%s226 + $0xe70] sm:$0xff]
        %v1889 = vld [vmem:[%s226 + $0xe78] sm:$0xff]
        %v1890 = vld [vmem:[%s226 + $0xe80] sm:$0xff]
        %v1891 = vld [vmem:[%s226 + $0xe88] sm:$0xff]
        %v1892 = vld [vmem:[%s226 + $0xe90] sm:$0xff]
        %v1893 = vld [vmem:[%s226 + $0xe98] sm:$0xff]
        %v1894 = vld [vmem:[%s226 + $0xea0] sm:$0xff]
        %v1895 = vld [vmem:[%s226 + $0xea8] sm:$0xff]
        %v1896 = vld [vmem:[%s226 + $0xeb0] sm:$0xff]
        %v1897 = vld [vmem:[%s226 + $0xeb8] sm:$0xff]
        %v1898 = vld [vmem:[%s226 + $0xec0] sm:$0xff]
        %v1899 = vld [vmem:[%s226 + $0xec8] sm:$0xff]
        %v1900 = vld [vmem:[%s226 + $0xed0] sm:$0xff]
        %v1901 = vld [vmem:[%s226 + $0xed8] sm:$0xff]
        %v1902 = vld [vmem:[%s226 + $0xee0] sm:$0xff]
        %v1903 = vld [vmem:[%s226 + $0xee8] sm:$0xff]
        %v1904 = vld [vmem:[%s226 + $0xef0] sm:$0xff]
        %v1905 = vld [vmem:[%s226 + $0xef8] sm:$0xff]
        %v1906 = vld [vmem:[%s226 + $0xf00] sm:$0xff]
        %v1907 = vld [vmem:[%s226 + $0xf08] sm:$0xff]
        %v1908 = vld [vmem:[%s226 + $0xf10] sm:$0xff]
        %v1909 = vld [vmem:[%s226 + $0xf18] sm:$0xff]
        %v1910 = vld [vmem:[%s226 + $0xf20] sm:$0xff]
        %v1911 = vld [vmem:[%s226 + $0xf28] sm:$0xff]
        %v1912 = vld [vmem:[%s226 + $0xf30] sm:$0xff]
        %v1913 = vld [vmem:[%s226 + $0xf38] sm:$0xff]
        %v1914 = vld [vmem:[%s226 + $0xf40] sm:$0xff]
        %v1915 = vld [vmem:[%s226 + $0xf48] sm:$0xff]
        %v1916 = vld [vmem:[%s226 + $0xf50] sm:$0xff]
        %v1917 = vld [vmem:[%s226 + $0xf58] sm:$0xff]
        %v1918 = vld [vmem:[%s226 + $0xf60] sm:$0xff]
        %v1919 = vld [vmem:[%s226 + $0xf68] sm:$0xff]
        %v1920 = vld [vmem:[%s226 + $0xf70] sm:$0xff]
        %v1921 = vld [vmem:[%s226 + $0xf78] sm:$0xff]
        %v1922 = vld [vmem:[%s226 + $0xf80] sm:$0xff]
        %v1923 = vld [vmem:[%s226 + $0xf88] sm:$0xff]
        %v1924 = vld [vmem:[%s226 + $0xf90] sm:$0xff]
        %v1925 = vld [vmem:[%s226 + $0xf98] sm:$0xff]
        %v1926 = vld [vmem:[%s226 + $0xfa0] sm:$0xff]
        %v1927 = vld [vmem:[%s226 + $0xfa8] sm:$0xff]
        %v1928 = vld [vmem:[%s226 + $0xfb0] sm:$0xff]
        %v1929 = vld [vmem:[%s226 + $0xfb8] sm:$0xff]
        %v1930 = vld [vmem:[%s226 + $0xfc0] sm:$0xff]
        %v1931 = vld [vmem:[%s226 + $0xfc8] sm:$0xff]
        %v1932 = vld [vmem:[%s226 + $0xfd0] sm:$0xff]
        %v1933 = vld [vmem:[%s226 + $0xfd8] sm:$0xff]
        %v1934 = vld [vmem:[%s226 + $0xfe0] sm:$0xff]
        %v1935 = vld [vmem:[%s226 + $0xfe8] sm:$0xff]
        %v1936 = vld [vmem:[%s226 + $0xff0] sm:$0xff]
        %v1937 = vld [vmem:[%s226 + $0xff8] sm:$0xff]
        %1938 = vmatprep.subr.mxu0 %v1427
        %1939 = vmatpush1.msra.mxu0 %v1426
        %1940 = vmatprep.subr.mxu0 %v1435
        %1941 = vmatpush1.msra.mxu0 %v1434
        %1942 = vmatprep.subr.mxu0 %v1443
        %1943 = vmatpush1.msra.mxu0 %v1442
        %1944 = vmatprep.subr.mxu0 %v1451
        %1945 = vmatpush1.msra.mxu0 %v1450
        %1946 = vmatprep.subr.mxu0 %v1459
        %1947 = vmatpush1.msra.mxu0 %v1458
        %1948 = vmatprep.subr.mxu0 %v1467
        %1949 = vmatpush1.msra.mxu0 %v1466
        %1950 = vmatprep.subr.mxu0 %v1475
        %1951 = vmatpush1.msra.mxu0 %v1474
        %1952 = vmatprep.subr.mxu0 %v1483
        %1953 = vmatpush1.msra.mxu0 %v1482
        %1954 = vmatprep.subr.mxu0 %v1491
        %1955 = vmatpush1.msra.mxu0 %v1490
        %1956 = vmatprep.subr.mxu0 %v1499
        %1957 = vmatpush1.msra.mxu0 %v1498
        %1958 = vmatprep.subr.mxu0 %v1507
        %1959 = vmatpush1.msra.mxu0 %v1506
        %1960 = vmatprep.subr.mxu0 %v1515
        %1961 = vmatpush1.msra.mxu0 %v1514
        %1962 = vmatprep.subr.mxu0 %v1523
        %1963 = vmatpush1.msra.mxu0 %v1522
        %1964 = vmatprep.subr.mxu0 %v1531
        %1965 = vmatpush1.msra.mxu0 %v1530
        %1966 = vmatprep.subr.mxu0 %v1539
        %1967 = vmatpush1.msra.mxu0 %v1538
        %1968 = vmatprep.subr.mxu0 %v1547
        %1969 = vmatpush1.msra.mxu0 %v1546
        %1970 = vmatprep.subr.mxu0 %v1555
        %1971 = vmatpush1.msra.mxu0 %v1554
        %1972 = vmatprep.subr.mxu0 %v1563
        %1973 = vmatpush1.msra.mxu0 %v1562
        %1974 = vmatprep.subr.mxu0 %v1571
        %1975 = vmatpush1.msra.mxu0 %v1570
        %1976 = vmatprep.subr.mxu0 %v1579
        %1977 = vmatpush1.msra.mxu0 %v1578
        %1978 = vmatprep.subr.mxu0 %v1587
        %1979 = vmatpush1.msra.mxu0 %v1586
        %1980 = vmatprep.subr.mxu0 %v1595
        %1981 = vmatpush1.msra.mxu0 %v1594
        %1982 = vmatprep.subr.mxu0 %v1603
        %1983 = vmatpush1.msra.mxu0 %v1602
        %1984 = vmatprep.subr.mxu0 %v1611
        %1985 = vmatpush1.msra.mxu0 %v1610
        %1986 = vmatprep.subr.mxu0 %v1619
        %1987 = vmatpush1.msra.mxu0 %v1618
        %1988 = vmatprep.subr.mxu0 %v1627
        %1989 = vmatpush1.msra.mxu0 %v1626
        %1990 = vmatprep.subr.mxu0 %v1635
        %1991 = vmatpush1.msra.mxu0 %v1634
        %1992 = vmatprep.subr.mxu0 %v1643
        %1993 = vmatpush1.msra.mxu0 %v1642
        %1994 = vmatprep.subr.mxu0 %v1651
        %1995 = vmatpush1.msra.mxu0 %v1650
        %1996 = vmatprep.subr.mxu0 %v1659
        %1997 = vmatpush1.msra.mxu0 %v1658
        %1998 = vmatprep.subr.mxu0 %v1667
        %1999 = vmatpush1.msra.mxu0 %v1666
        %2000 = vmatprep.subr.mxu0 %v1675
        %2001 = vmatpush1.msra.mxu0 %v1674
        %2002 = vmatprep.mubr.f32.mxu0 %v1415
        %2003 = vmatmul.mubr.f32.gmra.mrb[0].mxu0 %v1414
        %v2004 = vpop.f32.mrb[0].mxu0
        %v2005 = vadd.f32 0.0, %v2004
        %v2006 = vpop.f32.mrb[0].mxu0
        %v2007 = vadd.f32 0.0, %v2006
        %2008 = vdwg.mxu0
        %2009 = vmatprep.subr.mxu0 %v1683
        %2010 = vmatpush1.msra.mxu0 %v1682
        %2011 = vmatprep.subr.mxu0 %v1691
        %2012 = vmatpush1.msra.mxu0 %v1690
        %2013 = vmatprep.subr.mxu0 %v1699
        %2014 = vmatpush1.msra.mxu0 %v1698
        %2015 = vmatprep.subr.mxu0 %v1707
        %2016 = vmatpush1.msra.mxu0 %v1706
        %2017 = vmatprep.subr.mxu0 %v1715
        %2018 = vmatpush1.msra.mxu0 %v1714
        %2019 = vmatprep.subr.mxu0 %v1723
        %2020 = vmatpush1.msra.mxu0 %v1722
        %2021 = vmatprep.subr.mxu0 %v1731
        %2022 = vmatpush1.msra.mxu0 %v1730
        %2023 = vmatprep.subr.mxu0 %v1739
        %2024 = vmatpush1.msra.mxu0 %v1738
        %2025 = vmatprep.subr.mxu0 %v1747
        %2026 = vmatpush1.msra.mxu0 %v1746
        %2027 = vmatprep.subr.mxu0 %v1755
        %2028 = vmatpush1.msra.mxu0 %v1754
        %2029 = vmatprep.subr.mxu0 %v1763
        %2030 = vmatpush1.msra.mxu0 %v1762
        %2031 = vmatprep.subr.mxu0 %v1771
        %2032 = vmatpush1.msra.mxu0 %v1770
        %2033 = vmatprep.subr.mxu0 %v1779
        %2034 = vmatpush1.msra.mxu0 %v1778
        %2035 = vmatprep.subr.mxu0 %v1787
        %2036 = vmatpush1.msra.mxu0 %v1786
        %2037 = vmatprep.subr.mxu0 %v1795
        %2038 = vmatpush1.msra.mxu0 %v1794
        %2039 = vmatprep.subr.mxu0 %v1803
        %2040 = vmatpush1.msra.mxu0 %v1802
        %2041 = vmatprep.subr.mxu0 %v1811
        %2042 = vmatpush1.msra.mxu0 %v1810
        %2043 = vmatprep.subr.mxu0 %v1819
        %2044 = vmatpush1.msra.mxu0 %v1818
        %2045 = vmatprep.subr.mxu0 %v1827
        %2046 = vmatpush1.msra.mxu0 %v1826
        %2047 = vmatprep.subr.mxu0 %v1835
        %2048 = vmatpush1.msra.mxu0 %v1834
        %2049 = vmatprep.subr.mxu0 %v1843
        %2050 = vmatpush1.msra.mxu0 %v1842
        %2051 = vmatprep.subr.mxu0 %v1851
        %2052 = vmatpush1.msra.mxu0 %v1850
        %2053 = vmatprep.subr.mxu0 %v1859
        %2054 = vmatpush1.msra.mxu0 %v1858
        %2055 = vmatprep.subr.mxu0 %v1867
        %2056 = vmatpush1.msra.mxu0 %v1866
        %2057 = vmatprep.subr.mxu0 %v1875
        %2058 = vmatpush1.msra.mxu0 %v1874
        %2059 = vmatprep.subr.mxu0 %v1883
        %2060 = vmatpush1.msra.mxu0 %v1882
        %2061 = vmatprep.subr.mxu0 %v1891
        %2062 = vmatpush1.msra.mxu0 %v1890
        %2063 = vmatprep.subr.mxu0 %v1899
        %2064 = vmatpush1.msra.mxu0 %v1898
        %2065 = vmatprep.subr.mxu0 %v1907
        %2066 = vmatpush1.msra.mxu0 %v1906
        %2067 = vmatprep.subr.mxu0 %v1915
        %2068 = vmatpush1.msra.mxu0 %v1914
        %2069 = vmatprep.subr.mxu0 %v1923
        %2070 = vmatpush1.msra.mxu0 %v1922
        %2071 = vmatprep.subr.mxu0 %v1931
        %2072 = vmatpush1.msra.mxu0 %v1930
        %2073 = vmatprep.mubr.f32.mxu0 %v1417
        %2074 = vmatmul.mubr.f32.gmra.mrb[0].mxu0 %v1416
        %v2075 = vpop.f32.mrb[0].mxu0
        %v2076 = vadd.f32 %v2005, %v2075
        %v2077 = vpop.f32.mrb[0].mxu0
        %v2078 = vadd.f32 %v2007, %v2077
        %2079 = vdwg.mxu0
        %2080 = vmatprep.subr.mxu0 %v1429
        %2081 = vmatpush1.msra.mxu0 %v1428
        %2082 = vmatprep.subr.mxu0 %v1437
        %2083 = vmatpush1.msra.mxu0 %v1436
        %2084 = vmatprep.subr.mxu0 %v1445
        %2085 = vmatpush1.msra.mxu0 %v1444
        %2086 = vmatprep.subr.mxu0 %v1453
        %2087 = vmatpush1.msra.mxu0 %v1452
        %2088 = vmatprep.subr.mxu0 %v1461
        %2089 = vmatpush1.msra.mxu0 %v1460
        %2090 = vmatprep.subr.mxu0 %v1469
        %2091 = vmatpush1.msra.mxu0 %v1468
        %2092 = vmatprep.subr.mxu0 %v1477
        %2093 = vmatpush1.msra.mxu0 %v1476
        %2094 = vmatprep.subr.mxu0 %v1485
        %2095 = vmatpush1.msra.mxu0 %v1484
        %2096 = vmatprep.subr.mxu0 %v1493
        %2097 = vmatpush1.msra.mxu0 %v1492
        %2098 = vmatprep.subr.mxu0 %v1501
        %2099 = vmatpush1.msra.mxu0 %v1500
        %2100 = vmatprep.subr.mxu0 %v1509
        %2101 = vmatpush1.msra.mxu0 %v1508
        %2102 = vmatprep.subr.mxu0 %v1517
        %2103 = vmatpush1.msra.mxu0 %v1516
        %2104 = vmatprep.subr.mxu0 %v1525
        %2105 = vmatpush1.msra.mxu0 %v1524
        %2106 = vmatprep.subr.mxu0 %v1533
        %2107 = vmatpush1.msra.mxu0 %v1532
        %2108 = vmatprep.subr.mxu0 %v1541
        %2109 = vmatpush1.msra.mxu0 %v1540
        %2110 = vmatprep.subr.mxu0 %v1549
        %2111 = vmatpush1.msra.mxu0 %v1548
        %2112 = vmatprep.subr.mxu0 %v1557
        %2113 = vmatpush1.msra.mxu0 %v1556
        %2114 = vmatprep.subr.mxu0 %v1565
        %2115 = vmatpush1.msra.mxu0 %v1564
        %2116 = vmatprep.subr.mxu0 %v1573
        %2117 = vmatpush1.msra.mxu0 %v1572
        %2118 = vmatprep.subr.mxu0 %v1581
        %2119 = vmatpush1.msra.mxu0 %v1580
        %2120 = vmatprep.subr.mxu0 %v1589
        %2121 = vmatpush1.msra.mxu0 %v1588
        %2122 = vmatprep.subr.mxu0 %v1597
        %2123 = vmatpush1.msra.mxu0 %v1596
        %2124 = vmatprep.subr.mxu0 %v1605
        %2125 = vmatpush1.msra.mxu0 %v1604
        %2126 = vmatprep.subr.mxu0 %v1613
        %2127 = vmatpush1.msra.mxu0 %v1612
        %2128 = vmatprep.subr.mxu0 %v1621
        %2129 = vmatpush1.msra.mxu0 %v1620
        %2130 = vmatprep.subr.mxu0 %v1629
        %2131 = vmatpush1.msra.mxu0 %v1628
        %2132 = vmatprep.subr.mxu0 %v1637
        %2133 = vmatpush1.msra.mxu0 %v1636
        %2134 = vmatprep.subr.mxu0 %v1645
        %2135 = vmatpush1.msra.mxu0 %v1644
        %2136 = vmatprep.subr.mxu0 %v1653
        %2137 = vmatpush1.msra.mxu0 %v1652
        %2138 = vmatprep.subr.mxu0 %v1661
        %2139 = vmatpush1.msra.mxu0 %v1660
        %2140 = vmatprep.subr.mxu0 %v1669
        %2141 = vmatpush1.msra.mxu0 %v1668
        %2142 = vmatprep.subr.mxu0 %v1677
        %2143 = vmatpush1.msra.mxu0 %v1676
        %2144 = vmatprep.mubr.f32.mxu0 %v1415
        %2145 = vmatmul.mubr.f32.gmra.mrb[0].mxu0 %v1414
        %v2146 = vpop.f32.mrb[0].mxu0
        %v2147 = vadd.f32 0.0, %v2146
        %v2148 = vpop.f32.mrb[0].mxu0
        %v2149 = vadd.f32 0.0, %v2148
        %2150 = vdwg.mxu0
        %2151 = vmatprep.subr.mxu0 %v1685
        %2152 = vmatpush1.msra.mxu0 %v1684
        %2153 = vmatprep.subr.mxu0 %v1693
        %2154 = vmatpush1.msra.mxu0 %v1692
        %2155 = vmatprep.subr.mxu0 %v1701
        %2156 = vmatpush1.msra.mxu0 %v1700
        %2157 = vmatprep.subr.mxu0 %v1709
        %2158 = vmatpush1.msra.mxu0 %v1708
        %2159 = vmatprep.subr.mxu0 %v1717
        %2160 = vmatpush1.msra.mxu0 %v1716
        %2161 = vmatprep.subr.mxu0 %v1725
        %2162 = vmatpush1.msra.mxu0 %v1724
        %2163 = vmatprep.subr.mxu0 %v1733
        %2164 = vmatpush1.msra.mxu0 %v1732
        %2165 = vmatprep.subr.mxu0 %v1741
        %2166 = vmatpush1.msra.mxu0 %v1740
        %2167 = vmatprep.subr.mxu0 %v1749
        %2168 = vmatpush1.msra.mxu0 %v1748
        %2169 = vmatprep.subr.mxu0 %v1757
        %2170 = vmatpush1.msra.mxu0 %v1756
        %2171 = vmatprep.subr.mxu0 %v1765
        %2172 = vmatpush1.msra.mxu0 %v1764
        %2173 = vmatprep.subr.mxu0 %v1773
        %2174 = vmatpush1.msra.mxu0 %v1772
        %2175 = vmatprep.subr.mxu0 %v1781
        %2176 = vmatpush1.msra.mxu0 %v1780
        %2177 = vmatprep.subr.mxu0 %v1789
        %2178 = vmatpush1.msra.mxu0 %v1788
        %2179 = vmatprep.subr.mxu0 %v1797
        %2180 = vmatpush1.msra.mxu0 %v1796
        %2181 = vmatprep.subr.mxu0 %v1805
        %2182 = vmatpush1.msra.mxu0 %v1804
        %2183 = vmatprep.subr.mxu0 %v1813
        %2184 = vmatpush1.msra.mxu0 %v1812
        %2185 = vmatprep.subr.mxu0 %v1821
        %2186 = vmatpush1.msra.mxu0 %v1820
        %2187 = vmatprep.subr.mxu0 %v1829
        %2188 = vmatpush1.msra.mxu0 %v1828
        %2189 = vmatprep.subr.mxu0 %v1837
        %2190 = vmatpush1.msra.mxu0 %v1836
        %2191 = vmatprep.subr.mxu0 %v1845
        %2192 = vmatpush1.msra.mxu0 %v1844
        %2193 = vmatprep.subr.mxu0 %v1853
        %2194 = vmatpush1.msra.mxu0 %v1852
        %2195 = vmatprep.subr.mxu0 %v1861
        %2196 = vmatpush1.msra.mxu0 %v1860
        %2197 = vmatprep.subr.mxu0 %v1869
        %2198 = vmatpush1.msra.mxu0 %v1868
        %2199 = vmatprep.subr.mxu0 %v1877
        %2200 = vmatpush1.msra.mxu0 %v1876
        %2201 = vmatprep.subr.mxu0 %v1885
        %2202 = vmatpush1.msra.mxu0 %v1884
        %2203 = vmatprep.subr.mxu0 %v1893
        %2204 = vmatpush1.msra.mxu0 %v1892
        %2205 = vmatprep.subr.mxu0 %v1901
        %2206 = vmatpush1.msra.mxu0 %v1900
        %2207 = vmatprep.subr.mxu0 %v1909
        %2208 = vmatpush1.msra.mxu0 %v1908
        %2209 = vmatprep.subr.mxu0 %v1917
        %2210 = vmatpush1.msra.mxu0 %v1916
        %2211 = vmatprep.subr.mxu0 %v1925
        %2212 = vmatpush1.msra.mxu0 %v1924
        %2213 = vmatprep.subr.mxu0 %v1933
        %2214 = vmatpush1.msra.mxu0 %v1932
        %2215 = vmatprep.mubr.f32.mxu0 %v1417
        %2216 = vmatmul.mubr.f32.gmra.mrb[0].mxu0 %v1416
        %v2217 = vpop.f32.mrb[0].mxu0
        %v2218 = vadd.f32 %v2147, %v2217
        %v2219 = vpop.f32.mrb[0].mxu0
        %v2220 = vadd.f32 %v2149, %v2219
        %2221 = vdwg.mxu0
        %2222 = vmatprep.subr.mxu0 %v1431
        %2223 = vmatpush1.msra.mxu0 %v1430
        %2224 = vmatprep.subr.mxu0 %v1439
        %2225 = vmatpush1.msra.mxu0 %v1438
        %2226 = vmatprep.subr.mxu0 %v1447
        %2227 = vmatpush1.msra.mxu0 %v1446
        %2228 = vmatprep.subr.mxu0 %v1455
        %2229 = vmatpush1.msra.mxu0 %v1454
        %2230 = vmatprep.subr.mxu0 %v1463
        %2231 = vmatpush1.msra.mxu0 %v1462
        %2232 = vmatprep.subr.mxu0 %v1471
        %2233 = vmatpush1.msra.mxu0 %v1470
        %2234 = vmatprep.subr.mxu0 %v1479
        %2235 = vmatpush1.msra.mxu0 %v1478
        %2236 = vmatprep.subr.mxu0 %v1487
        %2237 = vmatpush1.msra.mxu0 %v1486
        %2238 = vmatprep.subr.mxu0 %v1495
        %2239 = vmatpush1.msra.mxu0 %v1494
        %2240 = vmatprep.subr.mxu0 %v1503
        %2241 = vmatpush1.msra.mxu0 %v1502
        %2242 = vmatprep.subr.mxu0 %v1511
        %2243 = vmatpush1.msra.mxu0 %v1510
        %2244 = vmatprep.subr.mxu0 %v1519
        %2245 = vmatpush1.msra.mxu0 %v1518
        %2246 = vmatprep.subr.mxu0 %v1527
        %2247 = vmatpush1.msra.mxu0 %v1526
        %2248 = vmatprep.subr.mxu0 %v1535
        %2249 = vmatpush1.msra.mxu0 %v1534
        %2250 = vmatprep.subr.mxu0 %v1543
        %2251 = vmatpush1.msra.mxu0 %v1542
        %2252 = vmatprep.subr.mxu0 %v1551
        %2253 = vmatpush1.msra.mxu0 %v1550
        %2254 = vmatprep.subr.mxu0 %v1559
        %2255 = vmatpush1.msra.mxu0 %v1558
        %2256 = vmatprep.subr.mxu0 %v1567
        %2257 = vmatpush1.msra.mxu0 %v1566
        %2258 = vmatprep.subr.mxu0 %v1575
        %2259 = vmatpush1.msra.mxu0 %v1574
        %2260 = vmatprep.subr.mxu0 %v1583
        %2261 = vmatpush1.msra.mxu0 %v1582
        %2262 = vmatprep.subr.mxu0 %v1591
        %2263 = vmatpush1.msra.mxu0 %v1590
        %2264 = vmatprep.subr.mxu0 %v1599
        %2265 = vmatpush1.msra.mxu0 %v1598
        %2266 = vmatprep.subr.mxu0 %v1607
        %2267 = vmatpush1.msra.mxu0 %v1606
        %2268 = vmatprep.subr.mxu0 %v1615
        %2269 = vmatpush1.msra.mxu0 %v1614
        %2270 = vmatprep.subr.mxu0 %v1623
        %2271 = vmatpush1.msra.mxu0 %v1622
        %2272 = vmatprep.subr.mxu0 %v1631
        %2273 = vmatpush1.msra.mxu0 %v1630
        %2274 = vmatprep.subr.mxu0 %v1639
        %2275 = vmatpush1.msra.mxu0 %v1638
        %2276 = vmatprep.subr.mxu0 %v1647
        %2277 = vmatpush1.msra.mxu0 %v1646
        %2278 = vmatprep.subr.mxu0 %v1655
        %2279 = vmatpush1.msra.mxu0 %v1654
        %2280 = vmatprep.subr.mxu0 %v1663
        %2281 = vmatpush1.msra.mxu0 %v1662
        %2282 = vmatprep.subr.mxu0 %v1671
        %2283 = vmatpush1.msra.mxu0 %v1670
        %2284 = vmatprep.subr.mxu0 %v1679
        %2285 = vmatpush1.msra.mxu0 %v1678
        %2286 = vmatprep.mubr.f32.mxu0 %v1415
        %2287 = vmatmul.mubr.f32.gmra.mrb[0].mxu0 %v1414
        %v2288 = vpop.f32.mrb[0].mxu0
        %v2289 = vadd.f32 0.0, %v2288
        %v2290 = vpop.f32.mrb[0].mxu0
        %v2291 = vadd.f32 0.0, %v2290
        %2292 = vdwg.mxu0
        %2293 = vmatprep.subr.mxu0 %v1687
        %2294 = vmatpush1.msra.mxu0 %v1686
        %2295 = vmatprep.subr.mxu0 %v1695
        %2296 = vmatpush1.msra.mxu0 %v1694
        %2297 = vmatprep.subr.mxu0 %v1703
        %2298 = vmatpush1.msra.mxu0 %v1702
        %2299 = vmatprep.subr.mxu0 %v1711
        %2300 = vmatpush1.msra.mxu0 %v1710
        %2301 = vmatprep.subr.mxu0 %v1719
        %2302 = vmatpush1.msra.mxu0 %v1718
        %2303 = vmatprep.subr.mxu0 %v1727
        %2304 = vmatpush1.msra.mxu0 %v1726
        %2305 = vmatprep.subr.mxu0 %v1735
        %2306 = vmatpush1.msra.mxu0 %v1734
        %2307 = vmatprep.subr.mxu0 %v1743
        %2308 = vmatpush1.msra.mxu0 %v1742
        %2309 = vmatprep.subr.mxu0 %v1751
        %2310 = vmatpush1.msra.mxu0 %v1750
        %2311 = vmatprep.subr.mxu0 %v1759
        %2312 = vmatpush1.msra.mxu0 %v1758
        %2313 = vmatprep.subr.mxu0 %v1767
        %2314 = vmatpush1.msra.mxu0 %v1766
        %2315 = vmatprep.subr.mxu0 %v1775
        %2316 = vmatpush1.msra.mxu0 %v1774
        %2317 = vmatprep.subr.mxu0 %v1783
        %2318 = vmatpush1.msra.mxu0 %v1782
        %2319 = vmatprep.subr.mxu0 %v1791
        %2320 = vmatpush1.msra.mxu0 %v1790
        %2321 = vmatprep.subr.mxu0 %v1799
        %2322 = vmatpush1.msra.mxu0 %v1798
        %2323 = vmatprep.subr.mxu0 %v1807
        %2324 = vmatpush1.msra.mxu0 %v1806
        %2325 = vmatprep.subr.mxu0 %v1815
        %2326 = vmatpush1.msra.mxu0 %v1814
        %2327 = vmatprep.subr.mxu0 %v1823
        %2328 = vmatpush1.msra.mxu0 %v1822
        %2329 = vmatprep.subr.mxu0 %v1831
        %2330 = vmatpush1.msra.mxu0 %v1830
        %2331 = vmatprep.subr.mxu0 %v1839
        %2332 = vmatpush1.msra.mxu0 %v1838
        %2333 = vmatprep.subr.mxu0 %v1847
        %2334 = vmatpush1.msra.mxu0 %v1846
        %2335 = vmatprep.subr.mxu0 %v1855
        %2336 = vmatpush1.msra.mxu0 %v1854
        %2337 = vmatprep.subr.mxu0 %v1863
        %2338 = vmatpush1.msra.mxu0 %v1862
        %2339 = vmatprep.subr.mxu0 %v1871
        %2340 = vmatpush1.msra.mxu0 %v1870
        %2341 = vmatprep.subr.mxu0 %v1879
        %2342 = vmatpush1.msra.mxu0 %v1878
        %2343 = vmatprep.subr.mxu0 %v1887
        %2344 = vmatpush1.msra.mxu0 %v1886
        %2345 = vmatprep.subr.mxu0 %v1895
        %2346 = vmatpush1.msra.mxu0 %v1894
        %2347 = vmatprep.subr.mxu0 %v1903
        %2348 = vmatpush1.msra.mxu0 %v1902
        %2349 = vmatprep.subr.mxu0 %v1911
        %2350 = vmatpush1.msra.mxu0 %v1910
        %2351 = vmatprep.subr.mxu0 %v1919
        %2352 = vmatpush1.msra.mxu0 %v1918
        %2353 = vmatprep.subr.mxu0 %v1927
        %2354 = vmatpush1.msra.mxu0 %v1926
        %2355 = vmatprep.subr.mxu0 %v1935
        %2356 = vmatpush1.msra.mxu0 %v1934
        %2357 = vmatprep.mubr.f32.mxu0 %v1417
        %2358 = vmatmul.mubr.f32.gmra.mrb[0].mxu0 %v1416
        %v2359 = vpop.f32.mrb[0].mxu0
        %v2360 = vadd.f32 %v2289, %v2359
        %v2361 = vpop.f32.mrb[0].mxu0
        %v2362 = vadd.f32 %v2291, %v2361
        %2363 = vdwg.mxu0
        %2364 = vmatprep.subr.mxu0 %v1433
        %2365 = vmatpush1.msra.mxu0 %v1432
        %2366 = vmatprep.subr.mxu0 %v1441
        %2367 = vmatpush1.msra.mxu0 %v1440
        %2368 = vmatprep.subr.mxu0 %v1449
        %2369 = vmatpush1.msra.mxu0 %v1448
        %2370 = vmatprep.subr.mxu0 %v1457
        %2371 = vmatpush1.msra.mxu0 %v1456
        %2372 = vmatprep.subr.mxu0 %v1465
        %2373 = vmatpush1.msra.mxu0 %v1464
        %2374 = vmatprep.subr.mxu0 %v1473
        %2375 = vmatpush1.msra.mxu0 %v1472
        %2376 = vmatprep.subr.mxu0 %v1481
        %2377 = vmatpush1.msra.mxu0 %v1480
        %2378 = vmatprep.subr.mxu0 %v1489
        %2379 = vmatpush1.msra.mxu0 %v1488
        %2380 = vmatprep.subr.mxu0 %v1497
        %2381 = vmatpush1.msra.mxu0 %v1496
        %2382 = vmatprep.subr.mxu0 %v1505
        %2383 = vmatpush1.msra.mxu0 %v1504
        %2384 = vmatprep.subr.mxu0 %v1513
        %2385 = vmatpush1.msra.mxu0 %v1512
        %2386 = vmatprep.subr.mxu0 %v1521
        %2387 = vmatpush1.msra.mxu0 %v1520
        %2388 = vmatprep.subr.mxu0 %v1529
        %2389 = vmatpush1.msra.mxu0 %v1528
        %2390 = vmatprep.subr.mxu0 %v1537
        %2391 = vmatpush1.msra.mxu0 %v1536
        %2392 = vmatprep.subr.mxu0 %v1545
        %2393 = vmatpush1.msra.mxu0 %v1544
        %2394 = vmatprep.subr.mxu0 %v1553
        %2395 = vmatpush1.msra.mxu0 %v1552
        %2396 = vmatprep.subr.mxu0 %v1561
        %2397 = vmatpush1.msra.mxu0 %v1560
        %2398 = vmatprep.subr.mxu0 %v1569
        %2399 = vmatpush1.msra.mxu0 %v1568
        %2400 = vmatprep.subr.mxu0 %v1577
        %2401 = vmatpush1.msra.mxu0 %v1576
        %2402 = vmatprep.subr.mxu0 %v1585
        %2403 = vmatpush1.msra.mxu0 %v1584
        %2404 = vmatprep.subr.mxu0 %v1593
        %2405 = vmatpush1.msra.mxu0 %v1592
        %2406 = vmatprep.subr.mxu0 %v1601
        %2407 = vmatpush1.msra.mxu0 %v1600
        %2408 = vmatprep.subr.mxu0 %v1609
        %2409 = vmatpush1.msra.mxu0 %v1608
        %2410 = vmatprep.subr.mxu0 %v1617
        %2411 = vmatpush1.msra.mxu0 %v1616
        %2412 = vmatprep.subr.mxu0 %v1625
        %2413 = vmatpush1.msra.mxu0 %v1624
        %2414 = vmatprep.subr.mxu0 %v1633
        %2415 = vmatpush1.msra.mxu0 %v1632
        %2416 = vmatprep.subr.mxu0 %v1641
        %2417 = vmatpush1.msra.mxu0 %v1640
        %2418 = vmatprep.subr.mxu0 %v1649
        %2419 = vmatpush1.msra.mxu0 %v1648
        %2420 = vmatprep.subr.mxu0 %v1657
        %2421 = vmatpush1.msra.mxu0 %v1656
        %2422 = vmatprep.subr.mxu0 %v1665
        %2423 = vmatpush1.msra.mxu0 %v1664
        %2424 = vmatprep.subr.mxu0 %v1673
        %2425 = vmatpush1.msra.mxu0 %v1672
        %2426 = vmatprep.subr.mxu0 %v1681
        %2427 = vmatpush1.msra.mxu0 %v1680
        %2428 = vmatprep.mubr.f32.mxu0 %v1415
        %2429 = vmatmul.mubr.f32.gmra.mrb[0].mxu0 %v1414
        %v2430 = vpop.f32.mrb[0].mxu0
        %v2431 = vadd.f32 0.0, %v2430
        %v2432 = vpop.f32.mrb[0].mxu0
        %v2433 = vadd.f32 0.0, %v2432
        %2434 = vdwg.mxu0
        %2435 = vmatprep.subr.mxu0 %v1689
        %2436 = vmatpush1.msra.mxu0 %v1688
        %2437 = vmatprep.subr.mxu0 %v1697
        %2438 = vmatpush1.msra.mxu0 %v1696
        %2439 = vmatprep.subr.mxu0 %v1705
        %2440 = vmatpush1.msra.mxu0 %v1704
        %2441 = vmatprep.subr.mxu0 %v1713
        %2442 = vmatpush1.msra.mxu0 %v1712
        %2443 = vmatprep.subr.mxu0 %v1721
        %2444 = vmatpush1.msra.mxu0 %v1720
        %2445 = vmatprep.subr.mxu0 %v1729
        %2446 = vmatpush1.msra.mxu0 %v1728
        %2447 = vmatprep.subr.mxu0 %v1737
        %2448 = vmatpush1.msra.mxu0 %v1736
        %2449 = vmatprep.subr.mxu0 %v1745
        %2450 = vmatpush1.msra.mxu0 %v1744
        %2451 = vmatprep.subr.mxu0 %v1753
        %2452 = vmatpush1.msra.mxu0 %v1752
        %2453 = vmatprep.subr.mxu0 %v1761
        %2454 = vmatpush1.msra.mxu0 %v1760
        %2455 = vmatprep.subr.mxu0 %v1769
        %2456 = vmatpush1.msra.mxu0 %v1768
        %2457 = vmatprep.subr.mxu0 %v1777
        %2458 = vmatpush1.msra.mxu0 %v1776
        %2459 = vmatprep.subr.mxu0 %v1785
        %2460 = vmatpush1.msra.mxu0 %v1784
        %2461 = vmatprep.subr.mxu0 %v1793
        %2462 = vmatpush1.msra.mxu0 %v1792
        %2463 = vmatprep.subr.mxu0 %v1801
        %2464 = vmatpush1.msra.mxu0 %v1800
        %2465 = vmatprep.subr.mxu0 %v1809
        %2466 = vmatpush1.msra.mxu0 %v1808
        %2467 = vmatprep.subr.mxu0 %v1817
        %2468 = vmatpush1.msra.mxu0 %v1816
        %2469 = vmatprep.subr.mxu0 %v1825
        %2470 = vmatpush1.msra.mxu0 %v1824
        %2471 = vmatprep.subr.mxu0 %v1833
        %2472 = vmatpush1.msra.mxu0 %v1832
        %2473 = vmatprep.subr.mxu0 %v1841
        %2474 = vmatpush1.msra.mxu0 %v1840
        %2475 = vmatprep.subr.mxu0 %v1849
        %2476 = vmatpush1.msra.mxu0 %v1848
        %2477 = vmatprep.subr.mxu0 %v1857
        %2478 = vmatpush1.msra.mxu0 %v1856
        %2479 = vmatprep.subr.mxu0 %v1865
        %2480 = vmatpush1.msra.mxu0 %v1864
        %2481 = vmatprep.subr.mxu0 %v1873
        %2482 = vmatpush1.msra.mxu0 %v1872
        %2483 = vmatprep.subr.mxu0 %v1881
        %2484 = vmatpush1.msra.mxu0 %v1880
        %2485 = vmatprep.subr.mxu0 %v1889
        %2486 = vmatpush1.msra.mxu0 %v1888
        %2487 = vmatprep.subr.mxu0 %v1897
        %2488 = vmatpush1.msra.mxu0 %v1896
        %2489 = vmatprep.subr.mxu0 %v1905
        %2490 = vmatpush1.msra.mxu0 %v1904
        %2491 = vmatprep.subr.mxu0 %v1913
        %2492 = vmatpush1.msra.mxu0 %v1912
        %2493 = vmatprep.subr.mxu0 %v1921
        %2494 = vmatpush1.msra.mxu0 %v1920
        %2495 = vmatprep.subr.mxu0 %v1929
        %2496 = vmatpush1.msra.mxu0 %v1928
        %2497 = vmatprep.subr.mxu0 %v1937
        %2498 = vmatpush1.msra.mxu0 %v1936
        %2499 = vmatprep.mubr.f32.mxu0 %v1417
        %2500 = vmatmul.mubr.f32.gmra.mrb[0].mxu0 %v1416
        %v2501 = vpop.f32.mrb[0].mxu0
        %v2502 = vadd.f32 %v2431, %v2501
        %v2503 = vpop.f32.mrb[0].mxu0
        %v2504 = vadd.f32 %v2433, %v2503
        %2505 = vdwg.mxu0
        %v2506 = vadd.f32 %v1418, %v2076
        %v2507 = vadd.f32 %v1419, %v2078
        %v2508 = vadd.f32 %v1420, %v2218
        %v2509 = vadd.f32 %v1421, %v2220
        %v2510 = vadd.f32 %v1422, %v2360
        %v2511 = vadd.f32 %v1423, %v2362
        %v2512 = vadd.f32 %v1424, %v2502
        %v2513 = vadd.f32 %v1425, %v2504
        %2514 = vst [vmem:[#allocation9] sm:$0xff] %v2506
        %2515 = vst [vmem:[#allocation9 + $0x8] sm:$0xff] %v2507
        %2516 = vst [vmem:[#allocation9 + $0x10] sm:$0xff] %v2508
        %2517 = vst [vmem:[#allocation9 + $0x18] sm:$0xff] %v2509
        %2518 = vst [vmem:[#allocation9 + $0x20] sm:$0xff] %v2510
        %2519 = vst [vmem:[#allocation9 + $0x28] sm:$0xff] %v2511
        %2520 = vst [vmem:[#allocation9 + $0x30] sm:$0xff] %v2512
        %2521 = vst [vmem:[#allocation9 + $0x38] sm:$0xff] %v2513
        // Predicated region
        $region53: #{tpu_custom_call.1} parent=31 // pred_check
          %p2522 = pneg %p121
        $region54: #{tpu_custom_call.1} parent=31 // pred_check_branch
          %2524 = sbr.rel (%p2522) target = $region56
        $region55: #{tpu_custom_call.1} parent=31 // pred_region
          %s2526 = ssub.s32 1024, 1024
          %2527 = vsyncadd [#allocation5], %s2526
          %s2529 = sshll.u32 [#allocation9], 4
          %s2530 = int_to_ptr.vmem [resolvable:$true] %s2529
          %2532 = dma.vmem_to_hbm [thread:$0]  %s2530, 1024, %s3, [#allocation5]
        $region56: #{tpu_custom_call.1} parent=31 // pred_fallthru
          _
        // Predicated region
        $region57: #{tpu_custom_call.1} parent=31 // pred_check
          %p2533 = pneg %p121
        $region58: #{tpu_custom_call.1} parent=31 // pred_check_branch
          %2535 = sbr.rel (%p2533) target = $region60
        $region59: #{tpu_custom_call.1} parent=31 // pred_region
          %2536 = dma.done [#allocation5], 1024
        $region60: #{tpu_custom_call.1} parent=31 // pred_fallthru
          _
      $region32: #{tpu_custom_call.1} parent=5 // pred_fallthru
        _
      %p2537 = scmp.le.s32.totalorder 2, %s14
      // Predicated region
      $region61: #{tpu_custom_call.1} parent=5 // pred_check
        %p2538 = pneg %p2537
      $region62: #{tpu_custom_call.1} parent=5 // pred_check_branch
        %2540 = sbr.rel (%p2538) target = $region64
      $region63: #{tpu_custom_call.1} parent=5 // pred_region
        %s2541 = ssub.s32 %s14, 2
      $region64: #{tpu_custom_call.1} parent=5 // pred_fallthru
        _
    $region6: #{tpu_custom_call.1} parent=1 // loop_footer
      %s18 = sadd.s32 1, %s14
    $region7: #{tpu_custom_call.1} parent=1 // loop_footer_branch
      %13 = sbr.rel target = $region3
    $region8: #{tpu_custom_call.1} parent=1 // loop_exit
      _
    %2542 = vsyncpa [#allocation4], 1
    %s2543 = scalar_lea.sflag [#allocation4], 1
    %2544 = vsyncpa %s2543, 1
    %2545 = vsyncpa [#allocation7], 1
    %s2546 = scalar_lea.sflag [#allocation7], 1
    %2547 = vsyncpa %s2546, 1
    %2548 = vsyncpa [#allocation5], 1
    %s2549 = scalar_lea.sflag [#allocation5], 1
    %2550 = vsyncpa %s2549, 1

</llo_original>
